<compile_context>
chip_gen: v6e
topology: v6e:2x2x1
jax: 0.10.0
libtpu: 0.0.40
codegen_flags: <defaults>
</compile_context>

<pallas_src>
import functools

import numpy as np
import jax
import jax.numpy as jnp
from jax.experimental import pallas as pl
from jax.experimental.pallas import tpu as pltpu


# ----------------------------------------------------------------------------- helpers
def _round_up(x, m):
    return max(m, ((x + m - 1) // m) * m)


def _vmem_capacity_bytes():
    try:
        return int(pltpu.get_tpu_info().vmem_capacity_bytes)
    except Exception:
        return 64 * 1024 * 1024          # conservative default (v7x per-core VMEM)


def _pick_tm(Np, Dp):
    """Largest row tile in {512, 256, 128} that (a) divides Np, (b) leaves >= 2 grid steps
    so both v7x TensorCores get work, and (c) fits a ~75% VMEM budget assuming the resident
    slab may end up double-buffered plus ~6 f32 (TM, Np) temporaries."""
    budget = int(_vmem_capacity_bytes() * 0.75)
    slab = Np * Dp * 2                    # bf16 contrast slab
    for tm in (512, 256, 128):
        if Np % tm != 0:
            continue
        if tm > max(Np // 2, 128):        # keep grid >= 2 when possible (v7x megacore)
            continue
        need = 2 * slab + 6 * tm * Np * 4 + 2 * tm * Dp * 2 + 4 * Np * 4
        if need <= budget:
            return tm
    return 128


# ----------------------------------------------------------------------------- kernel
def _supcon_kernel(dims_ref, cf_ref, gidr_ref, gidc_ref, cnt_ref, out_ref, *,
                   temperature, base_temperature):
    """One row block of SupConLoss ('all' contrast mode).

    dims_ref: (1,)      i32 SMEM  [n] — number of real (non-padded) rows / cols
    cf_ref:   (Np, Dp)  bf16 VMEM resident contrast slab, rows pre-scaled by 1/sqrt(T);
                                  rows >= n are exactly zero (documented invariant)
    gidr_ref: (TM, 1)   i32 VMEM  group id per anchor row (-1 in padding)
    gidc_ref: (1, Np)   i32 VMEM  group id per contrast column (-1 in padding)
    cnt_ref:  (TM, 1)   f32 VMEM  exact positive count per anchor row (0 in padding)
    out_ref:  (TM, 1)   f32 VMEM  per-anchor loss (0 in padding)
    """
    n = dims_ref[0]
    tm = out_ref.shape[0]
    rstart = pl.multiple_of(pl.program_id(0) * tm, tm)

    # Anchor rows sliced out of the already-resident slab: no second HBM stream / lhs buffer.
    lhs = cf_ref[pl.ds(rstart, tm), :]                                    # (TM, Dp) bf16

    # (F F^T)/T on the MXU: both operands already carry 1/sqrt(T); f32 accumulation.
    logits = jax.lax.dot_general(
        lhs, cf_ref[...], (((1,), (1,)), ((), ())),
        preferred_element_type=jnp.float32)                               # (TM, Np) f32

    col = jax.lax.broadcasted_iota(jnp.int32, logits.shape, 1)
    row = jax.lax.broadcasted_iota(jnp.int32, logits.shape, 0) + rstart
    notself = row != col                                                  # 1 - eye
    denom_mask = (col < n) & notself                                      # real, non-self cols
    # Group-id equality == label-equality mask; padded columns carry gid == -1 so real
    # anchors never match them (no extra col < n term needed for the positives).
    pos_mask = notself & (gidr_ref[...] == gidc_ref[...])

    # Row max over *all* columns is a valid numerical-stability shift (log-softmax is
    # shift-invariant up to the +1e-8 epsilon; padded slab rows/cols are exactly zero).
    lmax = jnp.max(logits, axis=1, keepdims=True)
    shifted = logits - lmax                                               # <= 0 everywhere

    denom = jnp.sum(jnp.where(denom_mask, jnp.exp(shifted), jnp.float32(0.0)),
                    axis=1, keepdims=True) + jnp.float32(1e-8)            # exp_logits.sum + eps
    pos_sum = jnp.sum(jnp.where(pos_mask, shifted, jnp.float32(0.0)),
                      axis=1, keepdims=True)

    # sum_{j in pos} log_prob[j] = sum_pos(shifted) - |pos| * log(denom); |pos| precomputed
    # on host, so no (TM, Np) log_prob temporary and no in-kernel mask-count reduction.
    cnt = cnt_ref[...]
    num = pos_sum - cnt * jnp.log(denom)

    scale = jnp.float32(-(temperature / base_temperature))
    per_anchor = scale * num / (cnt + jnp.float32(1e-8))                  # (TM, 1)

    rows1 = jax.lax.broadcasted_iota(jnp.int32, per_anchor.shape, 0) + rstart
    out_ref[...] = jnp.where(rows1 < n, per_anchor, jnp.float32(0.0))


# ----------------------------------------------------------------------------- builder
@functools.lru_cache(maxsize=None)
def _build_supcon_fn(Np, Dp, TM, temperature, base_temperature, single_buffer):
    kernel = functools.partial(_supcon_kernel, temperature=temperature,
                               base_temperature=base_temperature)

    def const_spec(shape, index_map):
        # Inputs whose block index never changes: a second pipeline buffer is pure waste.
        if single_buffer:
            return pl.BlockSpec(shape, index_map, pipeline_mode=pl.Buffered(1))
        return pl.BlockSpec(shape, index_map)

    grid = (Np // TM,)
    vmem_limit = min(int(_vmem_capacity_bytes() * 0.8), 112 * 1024 * 1024)

    pc = pl.pallas_call(
        kernel,
        out_shape=jax.ShapeDtypeStruct((Np, 1), jnp.float32),
        grid_spec=pltpu.PrefetchScalarGridSpec(
            num_scalar_prefetch=1,
            grid=grid,
            in_specs=[
                const_spec((Np, Dp), lambda i, dims: (0, 0)),     # resident contrast slab
                pl.BlockSpec((TM, 1), lambda i, dims: (i, 0)),    # row group ids
                const_spec((1, Np), lambda i, dims: (0, 0)),      # col group ids
                pl.BlockSpec((TM, 1), lambda i, dims: (i, 0)),    # positive counts
            ],
            out_specs=pl.BlockSpec((TM, 1), lambda i, dims: (i, 0)),
        ),
        compiler_params=pltpu.CompilerParams(
            dimension_semantics=("parallel",),
            vmem_limit_bytes=vmem_limit),
    )

    def call(dims, base_slab, gather_idx, gid_rows, gid_cols, cnt):
        n = dims[0]
        # Per-depth row select into the fixed (Np, Dp) bucket stays on device; padded rows
        # are zeroed so the kernel's "pad rows are exactly zero" invariant holds.
        rows = jnp.take(base_slab, gather_idx, axis=0)
        rowvalid = jax.lax.broadcasted_iota(jnp.int32, (Np, 1), 0) < n
        rows = jnp.where(rowvalid, rows, jnp.zeros((), base_slab.dtype))
        per_anchor = pc(dims, rows, gid_rows, gid_cols, cnt)
        # loss.view(anchor_count, batch_size).mean() == mean over the n real anchors.
        return jnp.sum(per_anchor) / n.astype(jnp.float32)

    return jax.jit(call)


_SINGLE_BUFFER_OK = [None]     # None: unknown; True/False once probed


def _run_supcon(Np, Dp, temperature, base_temperature, args):
    TM = _pick_tm(Np, Dp)
    if _SINGLE_BUFFER_OK[0] is not False:
        try:
            fn = _build_supcon_fn(Np, Dp, TM, temperature, base_temperature, True)
            out = fn(*args)
            if _SINGLE_BUFFER_OK[0] is None:
                jax.block_until_ready(out)      # surface lowering/runtime issues once
                _SINGLE_BUFFER_OK[0] = True
            return out
        except Exception:
            _SINGLE_BUFFER_OK[0] = False        # pl.Buffered(1) unsupported -> default buffering
    fn = _build_supcon_fn(Np, Dp, TM, temperature, base_temperature, False)
    return fn(*args)


# ----------------------------------------------------------------------------- device glue
def _make_base_slab(features, Np, Dp, temperature):
    """View-major (V*B0, D) contrast features, pre-scaled by 1/sqrt(T) (so F F^T already
    carries 1/T), zero-padded to (Np, Dp), bf16.  Padding rows are EXACTLY zero."""
    B0, V, D = features.shape
    cf = np.transpose(features, (1, 0, 2)).reshape(B0 * V, D)
    cf = cf * np.float32(1.0 / np.sqrt(temperature))
    cf_p = np.zeros((Np, Dp), np.float32)
    cf_p[:B0 * V, :D] = cf
    return jnp.asarray(cf_p, jnp.bfloat16)


def _supcon_from_group_ids_device(base_slab, sample_idx, gid, B0, V, Np, Dp,
                                  temperature, base_temperature):
    """SupConLoss ('all' mode) where the (B,B) mask is the label-equality mask encoded by
    per-sample group ids (gid[i] == gid[j] <=> mask[i, j] == 1) — covers every call HMLC
    makes.  Returns a device scalar (no host sync)."""
    sample_idx = np.asarray(sample_idx, np.int64).reshape(-1)
    gid = np.asarray(gid, np.int32).reshape(-1)
    B_cur = sample_idx.shape[0]
    N = B_cur * V

    # Contrast row r (view-major) = view r // B_cur of current sample r % B_cur.
    r = np.arange(N)
    gather = np.zeros((Np,), np.int32)
    gather[:N] = ((r // B_cur) * B0 + sample_idx[r % B_cur]).astype(np.int32)

    gid_rows = np.full((Np,), -1, np.int32)
    gid_rows[:N] = np.tile(gid, V)

    counts = np.bincount(gid)                                         # samples per group
    cnt = np.zeros((Np,), np.float32)
    cnt[:N] = np.tile(V * counts[gid] - 1, V).astype(np.float32)      # positives excl. self

    args = (jnp.asarray([N], jnp.int32),
            base_slab,
            jnp.asarray(gather),
            jnp.asarray(gid_rows.reshape(Np, 1)),
            jnp.asarray(gid_rows.reshape(1, Np)),
            jnp.asarray(cnt.reshape(Np, 1)))
    return _run_supcon(Np, Dp, float(temperature), float(base_temperature), args)


def supcon_loss_from_group_ids(features, group_ids, temperature=0.07, base_temperature=0.07):
    """Standalone SupConLoss with the label-equality mask given as group ids."""
    features = np.asarray(features, np.float32)
    gid = np.asarray(group_ids, np.int32).reshape(-1)
    B, V, D = features.shape
    Np = _round_up(B * V, 256)       # multiple of 256: full 256x256 MXU output tiles (v6e/v7x)
    Dp = _round_up(D, 128)
    base_slab = _make_base_slab(features, Np, Dp, temperature)
    return _supcon_from_group_ids_device(base_slab, np.arange(B), gid, B, V, Np, Dp,
                                         temperature, base_temperature)


# ----------------------------------------------------------------------------- HMLC forward
def hmlc_forward(features, labels, label_depths, temperature=0.07,
                 base_temperature=0.07, loss_type="hmce"):
    """Mirrors HMLC.forward.  The depth loop / row dedup (`torch.unique(dim=0)`) has
    data-dependent output shapes, so the tiny label bookkeeping runs on the host; the
    feature slab is uploaded once and the per-depth row select + SupConLoss run on device
    through one cached Pallas executable (fixed padded bucket, real row count in SMEM).
    Per-depth losses stay on device; one sync at the end.
    Returns (cumulative_loss / num_label_cols, loss_by_depths / num_label_cols)."""
    features = np.asarray(features, np.float32)
    labels = np.asarray(labels)
    label_depths = np.asarray(label_depths)

    num_label_cols = labels.shape[1]
    B0, V, D = features.shape
    Np = _round_up(B0 * V, 256)
    Dp = _round_up(D, 128)
    base_slab = _make_base_slab(features, Np, Dp, temperature)   # uploaded once, device-resident

    mask = labels.copy()
    sample_idx = np.arange(B0)         # current (deduped) samples as indices into the batch
    cumulative_loss = jnp.float32(0.0)
    max_loss_lower_layer = jnp.float32(-jnp.inf)
    max_depths = int(label_depths.max()) + 1
    loss_by_depths = []

    for l in range(1, max_depths):
        depth_mask = (label_depths <= (max_depths - l)).astype(labels.dtype)
        mask = mask * depth_mask
        layer_labels = labels * mask

        # Group id per current sample: rows with identical layer_labels share an id.  This
        # encodes mask_labels[i,j] = all(layer_labels[i] == layer_labels[j]) exactly and
        # yields the first-occurrence dedup indices (same as the torch `unique` helper).
        _, unique_indices, inverse = np.unique(
            layer_labels, axis=0, return_index=True, return_inverse=True)
        gid = np.asarray(inverse).reshape(-1)

        layer_loss = _supcon_from_group_ids_device(
            base_slab, sample_idx, gid, B0, V, Np, Dp, temperature, base_temperature)

        if loss_type == "hmc":
            cumulative_loss = cumulative_loss + jnp.float32(2.0 ** float(l)) * layer_loss
        elif loss_type == "hce":
            layer_loss = jnp.maximum(max_loss_lower_layer, layer_loss)
            cumulative_loss = cumulative_loss + layer_loss
        elif loss_type == "hmce":
            # NOTE: the reference never updates max_loss_lower_layer (stays -inf), so this
            # max is a no-op; replicated as-is to match the reference control flow.
            layer_loss = jnp.maximum(max_loss_lower_layer, layer_loss)
            layer_loss = jnp.float32(2.0 ** (1.0 / float(l))) * layer_loss   # layer_penalty=pow_2
            cumulative_loss = cumulative_loss + layer_loss
            loss_by_depths.insert(0, layer_loss)
        else:
            raise NotImplementedError("Unknown loss")

        # TODO(synk): torch.unique(..., dim=0) has a data-dependent output size, so the
        # O(B*L) label dedup stays on host; features are only row-selected on device.
        labels = labels[unique_indices]
        mask = mask[unique_indices]
        sample_idx = sample_idx[unique_indices]

    cum = cumulative_loss / jnp.float32(num_label_cols)
    if loss_by_depths:
        by_depths = np.asarray(jax.device_get(jnp.stack(loss_by_depths))) / num_label_cols
    else:
        by_depths = np.zeros((0,), np.float32)
    return float(jax.device_get(cum)), by_depths


# ----------------------------------------------------------------------------- main
if __name__ == "__main__":
    key = jax.random.PRNGKey(0)
    B, L, D = 8, 4, 32   # batch, num_labels (== n_views for SupConLoss), feature_dim
    k1, k2 = jax.random.split(key)

    features = jax.random.normal(k1, (B, L, D), dtype=jnp.float32)
    features = features / jnp.linalg.norm(features, axis=-1, keepdims=True)
    labels = jax.random.randint(k2, (B, L), 0, 3, dtype=jnp.int32)
    label_depths = jnp.arange(L, dtype=jnp.int32)   # depths 0..L-1 -> max_depths = L

    cum_loss, loss_by_depths = hmlc_forward(
        np.asarray(features), np.asarray(labels), np.asarray(label_depths))

    # Run the SupConLoss kernel once more standalone and block on its device result.
    lab_np = np.asarray(labels)
    _, _, inv0 = np.unique(lab_np, axis=0, return_index=True, return_inverse=True)
    standalone = supcon_loss_from_group_ids(np.asarray(features), inv0)
    standalone = jax.block_until_ready(standalone)

    assert np.isfinite(cum_loss)
    assert np.all(np.isfinite(loss_by_depths))
    assert np.isfinite(float(standalone))
    print("KERNEL_OK")
</pallas_src>

<mosaic_0001>
module attributes {stable_mosaic.version = 11 : i64} {
  func.func @_supcon_kernel(%arg0: i32, %arg1: memref<1xi32, #tpu.memory_space<smem>>, %arg2: memref<256x128xbf16, #tpu.memory_space<vmem>>, %arg3: memref<128x1xi32, #tpu.memory_space<vmem>>, %arg4: memref<1x256xi32, #tpu.memory_space<vmem>>, %arg5: memref<128x1xf32, #tpu.memory_space<vmem>>, %arg6: memref<128x1xf32, #tpu.memory_space<vmem>>) attributes {dimension_semantics = [#tpu.dimension_semantics<parallel>], iteration_bounds = array<i64: 2>, scalar_prefetch = 1 : i64, scratch_operands = 0 : i64, tpu.core_type = #tpu.core_type<tc>, window_params = [{pipeline_mode = #tpu.pipeline_mode<synchronous>, transform_indices = @transform_0, window_bounds = array<i64: 256, 128>}, {transform_indices = @transform_1, window_bounds = array<i64: 128, 1>}, {pipeline_mode = #tpu.pipeline_mode<synchronous>, transform_indices = @transform_2, window_bounds = array<i64: 1, 256>}, {transform_indices = @transform_3, window_bounds = array<i64: 128, 1>}, {transform_indices = @transform_4, window_bounds = array<i64: 128, 1>}]} {
    %c0 = arith.constant 0 : index
    %0 = memref.load %arg1[%c0] : memref<1xi32, #tpu.memory_space<smem>>
    %c128_i32 = arith.constant 128 : i32
    %1 = arith.muli %arg0, %c128_i32 : i32
    %2 = tpu.assume_multiple %1, 128 : i32
    %3 = arith.index_cast %2 : i32 to index
    %c0_0 = arith.constant 0 : index
    %4 = vector.load %arg2[%3, %c0_0] : memref<256x128xbf16, #tpu.memory_space<vmem>>, vector<128x128xbf16>
    %c0_1 = arith.constant 0 : index
    %c0_2 = arith.constant 0 : index
    %5 = vector.load %arg2[%c0_1, %c0_2] : memref<256x128xbf16, #tpu.memory_space<vmem>>, vector<256x128xbf16>
    %cst = arith.constant dense<0.000000e+00> : vector<128x256xf32>
    %6 = tpu.matmul %4, %5, %cst {dimension_numbers = #tpu.dot_dimension_numbers<[1], [1], [0], [0], [0, 0, 1, 0], [], []>} : vector<128x128xbf16>, vector<256x128xbf16>, vector<128x256xf32> -> vector<128x256xf32>
    %7 = tpu.iota {dimensions = array<i32: 1>} : vector<128x256xi32>
    %8 = tpu.iota {dimensions = array<i32: 0>} : vector<128x256xi32>
    %9 = vector.broadcast %2 : i32 to vector<128x256xi32>
    %10 = arith.addi %8, %9 : vector<128x256xi32>
    %11 = arith.cmpi ne, %10, %7 : vector<128x256xi32>
    %12 = vector.broadcast %0 : i32 to vector<128x256xi32>
    %13 = arith.cmpi slt, %7, %12 : vector<128x256xi32>
    %14 = arith.andi %13, %11 : vector<128x256xi1>
    %c0_3 = arith.constant 0 : index
    %c0_4 = arith.constant 0 : index
    %15 = vector.load %arg3[%c0_3, %c0_4] : memref<128x1xi32, #tpu.memory_space<vmem>>, vector<128x1xi32>
    %c0_5 = arith.constant 0 : index
    %c0_6 = arith.constant 0 : index
    %16 = vector.load %arg4[%c0_5, %c0_6] : memref<1x256xi32, #tpu.memory_space<vmem>>, vector<1x256xi32>
    %17 = vector.broadcast %15 : vector<128x1xi32> to vector<128x256xi32>
    %18 = vector.broadcast %16 : vector<1x256xi32> to vector<128x256xi32>
    %19 = arith.cmpi eq, %17, %18 : vector<128x256xi32>
    %20 = arith.andi %11, %19 : vector<128x256xi1>
    %cst_7 = arith.constant dense<0xFF800000> : vector<128xf32>
    %21 = vector.multi_reduction <maximumf>, %6, %cst_7 [1] : vector<128x256xf32> to vector<128xf32>
    %22 = vector.shape_cast %21 : vector<128xf32> to vector<128x1xf32>
    %23 = vector.broadcast %22 : vector<128x1xf32> to vector<128x256xf32>
    %24 = arith.subf %6, %23 : vector<128x256xf32>
    %25 = math.exp %24 : vector<128x256xf32>
    %cst_8 = arith.constant 0.000000e+00 : f32
    %26 = vector.broadcast %cst_8 : f32 to vector<128x256xf32>
    %27 = arith.select %14, %25, %26 : vector<128x256xi1>, vector<128x256xf32>
    %cst_9 = arith.constant dense<0.000000e+00> : vector<128xf32>
    %28 = vector.multi_reduction <add>, %27, %cst_9 [1] : vector<128x256xf32> to vector<128xf32>
    %29 = vector.shape_cast %28 : vector<128xf32> to vector<128x1xf32>
    %cst_10 = arith.constant 9.99999993E-9 : f32
    %30 = vector.broadcast %cst_10 : f32 to vector<128x1xf32>
    %31 = arith.addf %29, %30 : vector<128x1xf32>
    %cst_11 = arith.constant 0.000000e+00 : f32
    %32 = vector.broadcast %cst_11 : f32 to vector<128x256xf32>
    %33 = arith.select %20, %24, %32 : vector<128x256xi1>, vector<128x256xf32>
    %cst_12 = arith.constant dense<0.000000e+00> : vector<128xf32>
    %34 = vector.multi_reduction <add>, %33, %cst_12 [1] : vector<128x256xf32> to vector<128xf32>
    %35 = vector.shape_cast %34 : vector<128xf32> to vector<128x1xf32>
    %c0_13 = arith.constant 0 : index
    %c0_14 = arith.constant 0 : index
    %36 = vector.load %arg5[%c0_13, %c0_14] : memref<128x1xf32, #tpu.memory_space<vmem>>, vector<128x1xf32>
    %37 = math.log %31 : vector<128x1xf32>
    %38 = arith.mulf %36, %37 : vector<128x1xf32>
    %39 = arith.subf %35, %38 : vector<128x1xf32>
    %cst_15 = arith.constant -1.000000e+00 : f32
    %40 = vector.broadcast %cst_15 : f32 to vector<128x1xf32>
    %41 = arith.mulf %40, %39 : vector<128x1xf32>
    %cst_16 = arith.constant 9.99999993E-9 : f32
    %42 = vector.broadcast %cst_16 : f32 to vector<128x1xf32>
    %43 = arith.addf %36, %42 : vector<128x1xf32>
    %44 = arith.divf %41, %43 : vector<128x1xf32>
    %45 = tpu.iota {dimensions = array<i32: 0>} : vector<128x1xi32>
    %46 = vector.broadcast %2 : i32 to vector<128x1xi32>
    %47 = arith.addi %45, %46 : vector<128x1xi32>
    %48 = vector.broadcast %0 : i32 to vector<128x1xi32>
    %49 = arith.cmpi slt, %47, %48 : vector<128x1xi32>
    %cst_17 = arith.constant 0.000000e+00 : f32
    %50 = vector.broadcast %cst_17 : f32 to vector<128x1xf32>
    %51 = arith.select %49, %44, %50 : vector<128x1xi1>, vector<128x1xf32>
    %c0_18 = arith.constant 0 : index
    %c0_19 = arith.constant 0 : index
    %52 = vector.load %arg6[%c0_18, %c0_19] : memref<128x1xf32, #tpu.memory_space<vmem>>, vector<128x1xf32>
    tpu.vector_store %arg6[%c0_18, %c0_19], %51 {strides = array<i32>} : memref<128x1xf32, #tpu.memory_space<vmem>>, vector<128x1xf32>,
    return
  }
  func.func @transform_0(%arg0: i32, %arg1: memref<1xi32, #tpu.memory_space<smem>>) -> (i32, i32) {
    %c0_i32 = arith.constant 0 : i32
    %c0_i32_0 = arith.constant 0 : i32
    %c0_i32_1 = arith.constant 0 : i32
    return %c0_i32, %c0_i32_0 : i32, i32
  }
  func.func @transform_1(%arg0: i32, %arg1: memref<1xi32, #tpu.memory_space<smem>>) -> (i32, i32) {
    %c0_i32 = arith.constant 0 : i32
    %c0_i32_0 = arith.constant 0 : i32
    return %arg0, %c0_i32 : i32, i32
  }
  func.func @transform_2(%arg0: i32, %arg1: memref<1xi32, #tpu.memory_space<smem>>) -> (i32, i32) {
    %c0_i32 = arith.constant 0 : i32
    %c0_i32_0 = arith.constant 0 : i32
    %c0_i32_1 = arith.constant 0 : i32
    return %c0_i32, %c0_i32_0 : i32, i32
  }
  func.func @transform_3(%arg0: i32, %arg1: memref<1xi32, #tpu.memory_space<smem>>) -> (i32, i32) {
    %c0_i32 = arith.constant 0 : i32
    %c0_i32_0 = arith.constant 0 : i32
    return %arg0, %c0_i32 : i32, i32
  }
  func.func @transform_4(%arg0: i32, %arg1: memref<1xi32, #tpu.memory_space<smem>>) -> (i32, i32) {
    %c0_i32 = arith.constant 0 : i32
    %c0_i32_0 = arith.constant 0 : i32
    return %arg0, %c0_i32 : i32, i32
  }
}

module attributes {stable_mosaic.version = 11 : i64} {
  func.func @_supcon_kernel(%arg0: i32, %arg1: memref<1xi32, #tpu.memory_space<smem>>, %arg2: memref<256x128xbf16, #tpu.memory_space<vmem>>, %arg3: memref<128x1xi32, #tpu.memory_space<vmem>>, %arg4: memref<1x256xi32, #tpu.memory_space<vmem>>, %arg5: memref<128x1xf32, #tpu.memory_space<vmem>>, %arg6: memref<128x1xf32, #tpu.memory_space<vmem>>) attributes {dimension_semantics = [#tpu.dimension_semantics<parallel>], iteration_bounds = array<i64: 2>, scalar_prefetch = 1 : i64, scratch_operands = 0 : i64, tpu.core_type = #tpu.core_type<tc>, window_params = [{pipeline_mode = #tpu.pipeline_mode<synchronous>, transform_indices = @transform_0, window_bounds = array<i64: 256, 128>}, {transform_indices = @transform_1, window_bounds = array<i64: 128, 1>}, {pipeline_mode = #tpu.pipeline_mode<synchronous>, transform_indices = @transform_2, window_bounds = array<i64: 1, 256>}, {transform_indices = @transform_3, window_bounds = array<i64: 128, 1>}, {transform_indices = @transform_4, window_bounds = array<i64: 128, 1>}]} {
    %c0 = arith.constant 0 : index
    %0 = memref.load %arg1[%c0] : memref<1xi32, #tpu.memory_space<smem>>
    %c128_i32 = arith.constant 128 : i32
    %1 = arith.muli %arg0, %c128_i32 : i32
    %2 = tpu.assume_multiple %1, 128 : i32
    %3 = arith.index_cast %2 : i32 to index
    %c0_0 = arith.constant 0 : index
    %4 = vector.load %arg2[%3, %c0_0] : memref<256x128xbf16, #tpu.memory_space<vmem>>, vector<128x128xbf16>
    %c0_1 = arith.constant 0 : index
    %c0_2 = arith.constant 0 : index
    %5 = vector.load %arg2[%c0_1, %c0_2] : memref<256x128xbf16, #tpu.memory_space<vmem>>, vector<256x128xbf16>
    %cst = arith.constant dense<0.000000e+00> : vector<128x256xf32>
    %6 = tpu.matmul %4, %5, %cst {dimension_numbers = #tpu.dot_dimension_numbers<[1], [1], [0], [0], [0, 0, 1, 0], [], []>} : vector<128x128xbf16>, vector<256x128xbf16>, vector<128x256xf32> -> vector<128x256xf32>
    %7 = tpu.iota {dimensions = array<i32: 1>} : vector<128x256xi32>
    %8 = tpu.iota {dimensions = array<i32: 0>} : vector<128x256xi32>
    %9 = vector.broadcast %2 : i32 to vector<128x256xi32>
    %10 = arith.addi %8, %9 : vector<128x256xi32>
    %11 = arith.cmpi ne, %10, %7 : vector<128x256xi32>
    %12 = vector.broadcast %0 : i32 to vector<128x256xi32>
    %13 = arith.cmpi slt, %7, %12 : vector<128x256xi32>
    %14 = arith.andi %13, %11 : vector<128x256xi1>
    %c0_3 = arith.constant 0 : index
    %c0_4 = arith.constant 0 : index
    %15 = vector.load %arg3[%c0_3, %c0_4] : memref<128x1xi32, #tpu.memory_space<vmem>>, vector<128x1xi32>
    %c0_5 = arith.constant 0 : index
    %c0_6 = arith.constant 0 : index
    %16 = vector.load %arg4[%c0_5, %c0_6] : memref<1x256xi32, #tpu.memory_space<vmem>>, vector<1x256xi32>
    %17 = vector.broadcast %15 : vector<128x1xi32> to vector<128x256xi32>
    %18 = vector.broadcast %16 : vector<1x256xi32> to vector<128x256xi32>
    %19 = arith.cmpi eq, %17, %18 : vector<128x256xi32>
    %20 = arith.andi %11, %19 : vector<128x256xi1>
    %cst_7 = arith.constant dense<0xFF800000> : vector<128xf32>
    %21 = vector.multi_reduction <maximumf>, %6, %cst_7 [1] : vector<128x256xf32> to vector<128xf32>
    %22 = vector.shape_cast %21 : vector<128xf32> to vector<128x1xf32>
    %23 = vector.broadcast %22 : vector<128x1xf32> to vector<128x256xf32>
    %24 = arith.subf %6, %23 : vector<128x256xf32>
    %25 = math.exp %24 : vector<128x256xf32>
    %cst_8 = arith.constant 0.000000e+00 : f32
    %26 = vector.broadcast %cst_8 : f32 to vector<128x256xf32>
    %27 = arith.select %14, %25, %26 : vector<128x256xi1>, vector<128x256xf32>
    %cst_9 = arith.constant dense<0.000000e+00> : vector<128xf32>
    %28 = vector.multi_reduction <add>, %27, %cst_9 [1] : vector<128x256xf32> to vector<128xf32>
    %29 = vector.shape_cast %28 : vector<128xf32> to vector<128x1xf32>
    %cst_10 = arith.constant 9.99999993E-9 : f32
    %30 = vector.broadcast %cst_10 : f32 to vector<128x1xf32>
    %31 = arith.addf %29, %30 : vector<128x1xf32>
    %cst_11 = arith.constant 0.000000e+00 : f32
    %32 = vector.broadcast %cst_11 : f32 to vector<128x256xf32>
    %33 = arith.select %20, %24, %32 : vector<128x256xi1>, vector<128x256xf32>
    %cst_12 = arith.constant dense<0.000000e+00> : vector<128xf32>
    %34 = vector.multi_reduction <add>, %33, %cst_12 [1] : vector<128x256xf32> to vector<128xf32>
    %35 = vector.shape_cast %34 : vector<128xf32> to vector<128x1xf32>
    %c0_13 = arith.constant 0 : index
    %c0_14 = arith.constant 0 : index
    %36 = vector.load %arg5[%c0_13, %c0_14] : memref<128x1xf32, #tpu.memory_space<vmem>>, vector<128x1xf32>
    %37 = math.log %31 : vector<128x1xf32>
    %38 = arith.mulf %36, %37 : vector<128x1xf32>
    %39 = arith.subf %35, %38 : vector<128x1xf32>
    %cst_15 = arith.constant -1.000000e+00 : f32
    %40 = vector.broadcast %cst_15 : f32 to vector<128x1xf32>
    %41 = arith.mulf %40, %39 : vector<128x1xf32>
    %cst_16 = arith.constant 9.99999993E-9 : f32
    %42 = vector.broadcast %cst_16 : f32 to vector<128x1xf32>
    %43 = arith.addf %36, %42 : vector<128x1xf32>
    %44 = arith.divf %41, %43 : vector<128x1xf32>
    %45 = tpu.iota {dimensions = array<i32: 0>} : vector<128x1xi32>
    %46 = vector.broadcast %2 : i32 to vector<128x1xi32>
    %47 = arith.addi %45, %46 : vector<128x1xi32>
    %48 = vector.broadcast %0 : i32 to vector<128x1xi32>
    %49 = arith.cmpi slt, %47, %48 : vector<128x1xi32>
    %cst_17 = arith.constant 0.000000e+00 : f32
    %50 = vector.broadcast %cst_17 : f32 to vector<128x1xf32>
    %51 = arith.select %49, %44, %50 : vector<128x1xi1>, vector<128x1xf32>
    %c0_18 = arith.constant 0 : index
    %c0_19 = arith.constant 0 : index
    %52 = vector.load %arg6[%c0_18, %c0_19] : memref<128x1xf32, #tpu.memory_space<vmem>>, vector<128x1xf32>
    tpu.vector_store %arg6[%c0_18, %c0_19], %51 {strides = array<i32>} : memref<128x1xf32, #tpu.memory_space<vmem>>, vector<128x1xf32>,
    return
  }
  func.func @transform_0(%arg0: i32, %arg1: memref<1xi32, #tpu.memory_space<smem>>) -> (i32, i32) {
    %c0_i32 = arith.constant 0 : i32
    %c0_i32_0 = arith.constant 0 : i32
    %c0_i32_1 = arith.constant 0 : i32
    return %c0_i32, %c0_i32_0 : i32, i32
  }
  func.func @transform_1(%arg0: i32, %arg1: memref<1xi32, #tpu.memory_space<smem>>) -> (i32, i32) {
    %c0_i32 = arith.constant 0 : i32
    %c0_i32_0 = arith.constant 0 : i32
    return %arg0, %c0_i32 : i32, i32
  }
  func.func @transform_2(%arg0: i32, %arg1: memref<1xi32, #tpu.memory_space<smem>>) -> (i32, i32) {
    %c0_i32 = arith.constant 0 : i32
    %c0_i32_0 = arith.constant 0 : i32
    %c0_i32_1 = arith.constant 0 : i32
    return %c0_i32, %c0_i32_0 : i32, i32
  }
  func.func @transform_3(%arg0: i32, %arg1: memref<1xi32, #tpu.memory_space<smem>>) -> (i32, i32) {
    %c0_i32 = arith.constant 0 : i32
    %c0_i32_0 = arith.constant 0 : i32
    return %arg0, %c0_i32 : i32, i32
  }
  func.func @transform_4(%arg0: i32, %arg1: memref<1xi32, #tpu.memory_space<smem>>) -> (i32, i32) {
    %c0_i32 = arith.constant 0 : i32
    %c0_i32_0 = arith.constant 0 : i32
    return %arg0, %c0_i32 : i32, i32
  }
}

</mosaic_0001>

<llo_original>
// kernel: call.1
$region0: #{call.1}
  #allocation0 [shape = 'u32[]', space=smem, size = 0x4, offset = 0x4, fixed_abs, tag = 'smem constant byte address 0x4 - core index']
  #allocation1 [shape = 'u32[144,128]{1,0:T(1,128)}', space=vmem, size = 0x12000, scoped, tag = 'internal scratch']
  #allocation2 [shape = 's32[1]{0}', space=sflag, size = 0x4, scoped, tag = 'scoped memory for call.1']
  #allocation3 [shape = 's32[1]{0:T(128)S(6)}', space=smem, size = 0x200, scoped, tag = 'prefetched SMEM operand 0']
  %s0 = inlined_call_operand.<no memory space> [shape: s32[1], index: 0, kind: input, shape index: {}]
  %s1 = inlined_call_operand.vmem [shape: bf16[256,128], index: 1, kind: input, shape index: {}]
  %s2 = inlined_call_operand.vmem [shape: s32[256,1], index: 2, kind: input, shape index: {}]
  %s3 = inlined_call_operand.vmem [shape: s32[1,256], index: 3, kind: input, shape index: {}]
  %s4 = inlined_call_operand.vmem [shape: f32[256,1], index: 4, kind: input, shape index: {}]
  %s5 = inlined_call_operand.vmem [shape: f32[256,1], index: 5, kind: output, shape index: {}]
  %s6 = sld [smem:[#allocation0]]
  $region49: #{call.1} parent=0
    _
  %s8 = ssub.s32 1, %s6
  %s9 = scalar_select 0, %s8, %s6
  %10 = sst [smem:[#allocation3]] %s0
  loop: start=0, step=1, limit=4
  $region2: #{call.1} parent=0 // loop_pre_header
    _
  $region3: #{call.1} parent=0 // loop_header
    %s12 = sphi 0, %s16
    %p13 = scmp.ge.s32.totalorder %s12, 4
    %s20 = sphi 0, %s20
    %s22 = sphi 0, %s20
    %s23 = sphi 0, %s22
    %s37 = sphi 0, %s23
    %s43 = sphi 0, %s45
    %s46 = sphi 0, %s43
    %s47 = sphi 0, %s46
    %s63 = sphi 0, %s47
    %s67 = sphi 0, %s67
    %s69 = sphi 0, %s67
    %s70 = sphi 0, %s69
    %s84 = sphi 0, %s70
    %s90 = sphi 0, %s92
    %s93 = sphi 0, %s90
    %s94 = sphi 0, %s93
    %s110 = sphi 0, %s94
    %s116 = sphi 0, %s118
    %s119 = sphi 0, %s116
    %s120 = sphi 0, %s119
    %s136 = sphi 0, %s120
  $region4: #{call.1} parent=0 // loop_header_branch
    %15 = sbr.rel (%p13) target = $region8
  $region5: #{call.1} parent=0 // loop_body
    %s17 = ssub.s32 %s12, 1
    %s18 = ssub.s32 %s12, 2
    %s19 = sadd.s32 %s12, 1
    %s21 = sadd.s32 %s20, 1
    %p24 = scmp.eq.s32.totalorder %s12, 1
    %p25 = scmp.ne.s32.totalorder %s20, %s22
    %p26 = scmp.eq.s32.totalorder %s12, 0
    %p27 = por %p25, %p26
    %p28 = scmp.ne.s32.totalorder %s20, %s22
    %p29 = scmp.eq.s32.totalorder %s17, 1
    %p30 = por %p28, %p29
    %p31 = scmp.ne.s32.totalorder %s22, %s23
    %p32 = scmp.eq.s32.totalorder %s17, 0
    %p33 = por %p31, %p32
    %p34 = scmp.ne.s32.totalorder %s22, %s23
    %p35 = scmp.eq.s32.totalorder %s18, 1
    %p36 = por %p34, %p35
    %p38 = scmp.ne.s32.totalorder %s23, %s37
    %p39 = scmp.eq.s32.totalorder %s18, 0
    %p40 = por %p38, %p39
    %s41 = ssub.s32 %s12, %s19
    %p42 = scmp.eq.s32.totalorder %s41, 0
    %s44 = sadd.s32 %s43, 1
    %s45 = scalar_select %p42, %s43, %s44
    %p48 = pneg %p42
    %p49 = scmp.eq.s32.totalorder %s12, 1
    %p50 = por %p48, %p49
    %p51 = scmp.ne.s32.totalorder %s43, %s46
    %p52 = scmp.eq.s32.totalorder %s12, 0
    %p53 = por %p51, %p52
    %p54 = scmp.ne.s32.totalorder %s43, %s46
    %p55 = scmp.eq.s32.totalorder %s17, 1
    %p56 = por %p54, %p55
    %p57 = scmp.ne.s32.totalorder %s46, %s47
    %p58 = scmp.eq.s32.totalorder %s17, 0
    %p59 = por %p57, %p58
    %p60 = scmp.ne.s32.totalorder %s46, %s47
    %p61 = scmp.eq.s32.totalorder %s18, 1
    %p62 = por %p60, %p61
    %p64 = scmp.ne.s32.totalorder %s47, %s63
    %p65 = scmp.eq.s32.totalorder %s18, 0
    %p66 = por %p64, %p65
    %s68 = sadd.s32 %s67, 1
    %p71 = scmp.eq.s32.totalorder %s12, 1
    %p72 = scmp.ne.s32.totalorder %s67, %s69
    %p73 = scmp.eq.s32.totalorder %s12, 0
    %p74 = por %p72, %p73
    %p75 = scmp.ne.s32.totalorder %s67, %s69
    %p76 = scmp.eq.s32.totalorder %s17, 1
    %p77 = por %p75, %p76
    %p78 = scmp.ne.s32.totalorder %s69, %s70
    %p79 = scmp.eq.s32.totalorder %s17, 0
    %p80 = por %p78, %p79
    %p81 = scmp.ne.s32.totalorder %s69, %s70
    %p82 = scmp.eq.s32.totalorder %s18, 1
    %p83 = por %p81, %p82
    %p85 = scmp.ne.s32.totalorder %s70, %s84
    %p86 = scmp.eq.s32.totalorder %s18, 0
    %p87 = por %p85, %p86
    %s88 = ssub.s32 %s12, %s19
    %p89 = scmp.eq.s32.totalorder %s88, 0
    %s91 = sadd.s32 %s90, 1
    %s92 = scalar_select %p89, %s90, %s91
    %p95 = pneg %p89
    %p96 = scmp.eq.s32.totalorder %s12, 1
    %p97 = por %p95, %p96
    %p98 = scmp.ne.s32.totalorder %s90, %s93
    %p99 = scmp.eq.s32.totalorder %s12, 0
    %p100 = por %p98, %p99
    %p101 = scmp.ne.s32.totalorder %s90, %s93
    %p102 = scmp.eq.s32.totalorder %s17, 1
    %p103 = por %p101, %p102
    %p104 = scmp.ne.s32.totalorder %s93, %s94
    %p105 = scmp.eq.s32.totalorder %s17, 0
    %p106 = por %p104, %p105
    %p107 = scmp.ne.s32.totalorder %s93, %s94
    %p108 = scmp.eq.s32.totalorder %s18, 1
    %p109 = por %p107, %p108
    %p111 = scmp.ne.s32.totalorder %s94, %s110
    %p112 = scmp.eq.s32.totalorder %s18, 0
    %p113 = por %p111, %p112
    %s114 = ssub.s32 %s12, %s19
    %p115 = scmp.eq.s32.totalorder %s114, 0
    %s117 = sadd.s32 %s116, 1
    %s118 = scalar_select %p115, %s116, %s117
    %p121 = pneg %p115
    %p122 = scmp.eq.s32.totalorder %s12, 1
    %p123 = por %p121, %p122
    %p124 = scmp.ne.s32.totalorder %s116, %s119
    %p125 = scmp.eq.s32.totalorder %s12, 0
    %p126 = por %p124, %p125
    %p127 = scmp.ne.s32.totalorder %s116, %s119
    %p128 = scmp.eq.s32.totalorder %s17, 1
    %p129 = por %p127, %p128
    %p130 = scmp.ne.s32.totalorder %s119, %s120
    %p131 = scmp.eq.s32.totalorder %s17, 0
    %p132 = por %p130, %p131
    %p133 = scmp.ne.s32.totalorder %s119, %s120
    %p134 = scmp.eq.s32.totalorder %s18, 1
    %p135 = por %p133, %p134
    %p137 = scmp.ne.s32.totalorder %s120, %s136
    %p138 = scmp.eq.s32.totalorder %s18, 0
    %p139 = por %p137, %p138
    %p140 = scmp.le.s32.totalorder 1, %s12
    %p141 = scmp.lt.s32.totalorder %s12, 3
    %p142 = pnand %p140, %p141
    %p143 = pneg %p142
    // Predicated region
    $region9: #{call.1} parent=5 // pred_check
      _
    $region10: #{call.1} parent=5 // pred_check_branch
      %145 = sbr.rel (%p142) target = $region12
    $region11: #{call.1} parent=5 // pred_region
      %s146 = ssub.s32 %s12, 1
      // Predicated region
      $region13: #{call.1} parent=11 // pred_check
        %p147 = pneg %p33
      $region14: #{call.1} parent=11 // pred_check_branch
        %149 = sbr.rel (%p147) target = $region16
      $region15: #{call.1} parent=11 // pred_region
        _
      $region16: #{call.1} parent=11 // pred_fallthru
        _
      // Predicated region
      $region17: #{call.1} parent=11 // pred_check
        %p150 = pneg %p80
      $region18: #{call.1} parent=11 // pred_check_branch
        %152 = sbr.rel (%p150) target = $region20
      $region19: #{call.1} parent=11 // pred_region
        _
      $region20: #{call.1} parent=11 // pred_fallthru
        _
    $region12: #{call.1} parent=5 // pred_fallthru
      _
    %p153 = scmp.lt.s32.totalorder %s12, 2
    // Predicated region
    $region21: #{call.1} parent=5 // pred_check
      %p154 = pneg %p153
    $region22: #{call.1} parent=5 // pred_check_branch
      %156 = sbr.rel (%p154) target = $region24
    $region23: #{call.1} parent=5 // pred_region
      // Predicated region
      $region25: #{call.1} parent=23 // pred_check
        %p157 = pneg %p53
      $region26: #{call.1} parent=23 // pred_check_branch
        %159 = sbr.rel (%p157) target = $region28
      $region27: #{call.1} parent=23 // pred_region
        %s160 = smul.u32 16, %s12
        %p161 = scmp.lt.s32.totalorder %s160, 31
        %s162 = scalar_select %p161, %s160, 31
        %s163 = smul.addr %s162, 8
        %s164 = scalar_lea.vmem %s2, %s163
        %s165 = smul.u32 16, %s12
      $region28: #{call.1} parent=23 // pred_fallthru
        _
      // Predicated region
      $region29: #{call.1} parent=23 // pred_check
        %p166 = pneg %p100
      $region30: #{call.1} parent=23 // pred_check_branch
        %168 = sbr.rel (%p166) target = $region32
      $region31: #{call.1} parent=23 // pred_region
        %s169 = smul.u32 16, %s12
        %p170 = scmp.lt.s32.totalorder %s169, 31
        %s171 = scalar_select %p170, %s169, 31
        %s172 = smul.addr %s171, 8
        %s173 = scalar_lea.vmem %s4, %s172
        %s174 = smul.u32 16, %s12
      $region32: #{call.1} parent=23 // pred_fallthru
        _
    $region24: #{call.1} parent=5 // pred_fallthru
      _
    %p175 = scmp.le.s32.totalorder 1, %s12
    %p176 = scmp.lt.s32.totalorder %s12, 3
    %p177 = pnand %p175, %p176
    %p178 = pneg %p177
    // Predicated region
    $region33: #{call.1} parent=5 // pred_check
      _
    $region34: #{call.1} parent=5 // pred_check_branch
      %180 = sbr.rel (%p177) target = $region36
    $region35: #{call.1} parent=5 // pred_region
      %s181 = ssub.s32 %s12, 1
      %p182 = pneg %p33
      %p183 = pneg %p30
      %s184 = smul.u32 16, %s17
      %p185 = scmp.lt.s32.totalorder %s184, 31
      %s186 = scalar_select %p185, %s184, 31
      %s187 = smul.addr %s186, 8
      %s188 = scalar_lea.vmem %s2, %s187
      %p189 = pneg %p59
      %p190 = pneg %p56
      %p191 = pneg %p80
      %p192 = pneg %p77
      %s193 = smul.u32 16, %s17
      %p194 = scmp.lt.s32.totalorder %s193, 31
      %s195 = scalar_select %p194, %s193, 31
      %s196 = smul.addr %s195, 8
      %s197 = scalar_lea.vmem %s4, %s196
      %p198 = pneg %p106
      %p199 = pneg %p103
      %p200 = pneg %p132
      %p201 = pneg %p129
      %s202 = smul.u32 16, %s17
      %p203 = scmp.lt.s32.totalorder %s202, 31
      %s204 = scalar_select %p203, %s202, 31
      %s205 = smul.addr %s204, 8
      %s206 = scalar_lea.vmem %s5, %s205
      %s207 = smul.u32 16, %s17
      %p208 = scmp.lt.s32.totalorder %s207, 31
      %s209 = scalar_select %p208, %s207, 31
      %s210 = smul.addr %s209, 8
      %s211 = scalar_lea.vmem %s2, %s210
      %s212 = smul.u32 16, %s17
      %s213 = smul.u32 16, %s17
      %p214 = scmp.lt.s32.totalorder %s213, 31
      %s215 = scalar_select %p214, %s213, 31
      %s216 = smul.addr %s215, 8
      %s217 = scalar_lea.vmem %s4, %s216
      %s218 = smul.u32 16, %s17
      %s219 = smul.u32 16, %s17
      %p220 = scmp.lt.s32.totalorder %s219, 31
      %s221 = scalar_select %p220, %s219, 31
      %s222 = smul.addr %s221, 8
      %s223 = scalar_lea.vmem %s5, %s222
      %s224 = smul.u32 16, %s17
      %s226 = sld [smem:[#allocation3]]
      %s227 = smul.u32 %s17, 128
      %s228 = sshra.s32 %s227, 3
      %s229 = sand.u32 %s227, 7
      %s230 = smul.addr %s228, 4
      %s231 = scalar_lea.vmem %s1, %s230
      %v232 = vld [vmem:[%s231] sm:$0xf]
      %v233 = vld [vmem:[%s231 + $0x4] sm:$0xf]
      %v234 = vld [vmem:[%s231 + $0x8] sm:$0xf]
      %v235 = vld [vmem:[%s231 + $0xc] sm:$0xf]
      %v236 = vld [vmem:[%s231 + $0x10] sm:$0xf]
      %v237 = vld [vmem:[%s231 + $0x14] sm:$0xf]
      %v238 = vld [vmem:[%s231 + $0x18] sm:$0xf]
      %v239 = vld [vmem:[%s231 + $0x1c] sm:$0xf]
      %v240 = vld [vmem:[%s231 + $0x20] sm:$0xf]
      %v241 = vld [vmem:[%s231 + $0x24] sm:$0xf]
      %v242 = vld [vmem:[%s231 + $0x28] sm:$0xf]
      %v243 = vld [vmem:[%s231 + $0x2c] sm:$0xf]
      %v244 = vld [vmem:[%s231 + $0x30] sm:$0xf]
      %v245 = vld [vmem:[%s231 + $0x34] sm:$0xf]
      %v246 = vld [vmem:[%s231 + $0x38] sm:$0xf]
      %v247 = vld [vmem:[%s231 + $0x3c] sm:$0xf]
      %v248 = vld [vmem:[%s1] sm:$0xf]
      %v249 = vld [vmem:[%s1 + $0x4] sm:$0xf]
      %v250 = vld [vmem:[%s1 + $0x8] sm:$0xf]
      %v251 = vld [vmem:[%s1 + $0xc] sm:$0xf]
      %v252 = vld [vmem:[%s1 + $0x10] sm:$0xf]
      %v253 = vld [vmem:[%s1 + $0x14] sm:$0xf]
      %v254 = vld [vmem:[%s1 + $0x18] sm:$0xf]
      %v255 = vld [vmem:[%s1 + $0x1c] sm:$0xf]
      %v256 = vld [vmem:[%s1 + $0x20] sm:$0xf]
      %v257 = vld [vmem:[%s1 + $0x24] sm:$0xf]
      %v258 = vld [vmem:[%s1 + $0x28] sm:$0xf]
      %v259 = vld [vmem:[%s1 + $0x2c] sm:$0xf]
      %v260 = vld [vmem:[%s1 + $0x30] sm:$0xf]
      %v261 = vld [vmem:[%s1 + $0x34] sm:$0xf]
      %v262 = vld [vmem:[%s1 + $0x38] sm:$0xf]
      %v263 = vld [vmem:[%s1 + $0x3c] sm:$0xf]
      %v264 = vld [vmem:[%s1 + $0x40] sm:$0xf]
      %v265 = vld [vmem:[%s1 + $0x44] sm:$0xf]
      %v266 = vld [vmem:[%s1 + $0x48] sm:$0xf]
      %v267 = vld [vmem:[%s1 + $0x4c] sm:$0xf]
      %v268 = vld [vmem:[%s1 + $0x50] sm:$0xf]
      %v269 = vld [vmem:[%s1 + $0x54] sm:$0xf]
      %v270 = vld [vmem:[%s1 + $0x58] sm:$0xf]
      %v271 = vld [vmem:[%s1 + $0x5c] sm:$0xf]
      %v272 = vld [vmem:[%s1 + $0x60] sm:$0xf]
      %v273 = vld [vmem:[%s1 + $0x64] sm:$0xf]
      %v274 = vld [vmem:[%s1 + $0x68] sm:$0xf]
      %v275 = vld [vmem:[%s1 + $0x6c] sm:$0xf]
      %v276 = vld [vmem:[%s1 + $0x70] sm:$0xf]
      %v277 = vld [vmem:[%s1 + $0x74] sm:$0xf]
      %v278 = vld [vmem:[%s1 + $0x78] sm:$0xf]
      %v279 = vld [vmem:[%s1 + $0x7c] sm:$0xf]
      %v296 = vunpack.c.l.b16 %v232
      %v297 = vunpack.c.l.b16 %v233
      %v298 = vunpack.c.l.b16 %v234
      %v299 = vunpack.c.l.b16 %v235
      %v300 = vunpack.c.l.b16 %v236
      %v301 = vunpack.c.l.b16 %v237
      %v302 = vunpack.c.l.b16 %v238
      %v303 = vunpack.c.l.b16 %v239
      %v304 = vunpack.c.l.b16 %v240
      %v305 = vunpack.c.l.b16 %v241
      %v306 = vunpack.c.l.b16 %v242
      %v307 = vunpack.c.l.b16 %v243
      %v308 = vunpack.c.l.b16 %v244
      %v309 = vunpack.c.l.b16 %v245
      %v310 = vunpack.c.l.b16 %v246
      %v311 = vunpack.c.l.b16 %v247
      %v312 = vpack.c.b16 %v297, %v296
      %v313 = vpack.c.b16 %v299, %v298
      %v314 = vpack.c.b16 %v301, %v300
      %v315 = vpack.c.b16 %v303, %v302
      %v316 = vpack.c.b16 %v305, %v304
      %v317 = vpack.c.b16 %v307, %v306
      %v318 = vpack.c.b16 %v309, %v308
      %v319 = vpack.c.b16 %v311, %v310
      %v360 = vunpack.c.l.b16 %v248
      %v361 = vunpack.c.l.b16 %v249
      %v362 = vunpack.c.l.b16 %v250
      %v363 = vunpack.c.l.b16 %v251
      %v364 = vunpack.c.l.b16 %v252
      %v365 = vunpack.c.l.b16 %v253
      %v366 = vunpack.c.l.b16 %v254
      %v367 = vunpack.c.l.b16 %v255
      %v368 = vunpack.c.l.b16 %v256
      %v369 = vunpack.c.l.b16 %v257
      %v370 = vunpack.c.l.b16 %v258
      %v371 = vunpack.c.l.b16 %v259
      %v372 = vunpack.c.l.b16 %v260
      %v373 = vunpack.c.l.b16 %v261
      %v374 = vunpack.c.l.b16 %v262
      %v375 = vunpack.c.l.b16 %v263
      %v376 = vunpack.c.l.b16 %v264
      %v377 = vunpack.c.l.b16 %v265
      %v378 = vunpack.c.l.b16 %v266
      %v379 = vunpack.c.l.b16 %v267
      %v380 = vunpack.c.l.b16 %v268
      %v381 = vunpack.c.l.b16 %v269
      %v382 = vunpack.c.l.b16 %v270
      %v383 = vunpack.c.l.b16 %v271
      %v384 = vunpack.c.l.b16 %v272
      %v385 = vunpack.c.l.b16 %v273
      %v386 = vunpack.c.l.b16 %v274
      %v387 = vunpack.c.l.b16 %v275
      %v388 = vunpack.c.l.b16 %v276
      %v389 = vunpack.c.l.b16 %v277
      %v390 = vunpack.c.l.b16 %v278
      %v391 = vunpack.c.l.b16 %v279
      %v392 = vpack.c.b16 %v361, %v360
      %v393 = vpack.c.b16 %v363, %v362
      %v394 = vpack.c.b16 %v365, %v364
      %v395 = vpack.c.b16 %v367, %v366
      %v396 = vpack.c.b16 %v369, %v368
      %v397 = vpack.c.b16 %v371, %v370
      %v398 = vpack.c.b16 %v373, %v372
      %v399 = vpack.c.b16 %v375, %v374
      %v400 = vpack.c.b16 %v377, %v376
      %v401 = vpack.c.b16 %v379, %v378
      %v402 = vpack.c.b16 %v381, %v380
      %v403 = vpack.c.b16 %v383, %v382
      %v404 = vpack.c.b16 %v385, %v384
      %v405 = vpack.c.b16 %v387, %v386
      %v406 = vpack.c.b16 %v389, %v388
      %v407 = vpack.c.b16 %v391, %v390
      %424 = vmatprep.subr.bf16.mxu0 0
      %425 = vmatpush1.bf16.xpose.msra.mxu0 %v399
      %426 = vmatprep.subr.bf16.mxu0 0
      %427 = vmatpush1.bf16.xpose.msra.mxu0 %v398
      %428 = vmatprep.subr.bf16.mxu0 0
      %429 = vmatpush1.bf16.xpose.msra.mxu0 %v397
      %430 = vmatprep.subr.bf16.mxu0 0
      %431 = vmatpush1.bf16.xpose.msra.mxu0 %v396
      %432 = vmatprep.subr.bf16.mxu0 0
      %433 = vmatpush1.bf16.xpose.msra.mxu0 %v395
      %434 = vmatprep.subr.bf16.mxu0 0
      %435 = vmatpush1.bf16.xpose.msra.mxu0 %v394
      %436 = vmatprep.subr.bf16.mxu0 0
      %437 = vmatpush1.bf16.xpose.msra.mxu0 %v393
      %438 = vmatprep.subr.bf16.mxu0 0
      %439 = vmatpush1.bf16.xpose.msra.mxu0 %v392
      %440 = vmatprep.subr.bf16.mxu0 0
      %441 = vmatpush2.bf16.xpose.msra.mxu0 %v407
      %442 = vmatprep.subr.bf16.mxu0 0
      %443 = vmatpush2.bf16.xpose.msra.mxu0 %v406
      %444 = vmatprep.subr.bf16.mxu0 0
      %445 = vmatpush2.bf16.xpose.msra.mxu0 %v405
      %446 = vmatprep.subr.bf16.mxu0 0
      %447 = vmatpush2.bf16.xpose.msra.mxu0 %v404
      %448 = vmatprep.subr.bf16.mxu0 0
      %449 = vmatpush2.bf16.xpose.msra.mxu0 %v403
      %450 = vmatprep.subr.bf16.mxu0 0
      %451 = vmatpush2.bf16.xpose.msra.mxu0 %v402
      %452 = vmatprep.subr.bf16.mxu0 0
      %453 = vmatpush2.bf16.xpose.msra.mxu0 %v401
      %454 = vmatprep.subr.bf16.mxu0 0
      %455 = vmatpush2.bf16.xpose.msra.mxu0 %v400
      %456 = vmatprep.mubr.bf16.mxu0 0
      %457 = vmatmul.mubr.bf16.gmra.mxu0 %v312
      %v458 = vpop.f32.mrf.mxu0
      %v459 = vadd.f32 0.0, %v458
      %v460 = vpop.f32.mrf.mxu0
      %v461 = vadd.f32 0.0, %v460
      %v462 = vpop.f32.mrf.mxu0
      %v463 = vadd.f32 0.0, %v462
      %v464 = vpop.f32.mrf.mxu0
      %v465 = vadd.f32 0.0, %v464
      %466 = vmatprep.mubr.bf16.mxu0 0
      %467 = vmatmul.mubr.bf16.gmra.mxu0 %v313
      %v468 = vpop.f32.mrf.mxu0
      %v469 = vadd.f32 0.0, %v468
      %v470 = vpop.f32.mrf.mxu0
      %v471 = vadd.f32 0.0, %v470
      %v472 = vpop.f32.mrf.mxu0
      %v473 = vadd.f32 0.0, %v472
      %v474 = vpop.f32.mrf.mxu0
      %v475 = vadd.f32 0.0, %v474
      %476 = vmatprep.mubr.bf16.mxu0 0
      %477 = vmatmul.mubr.bf16.gmra.mxu0 %v314
      %v478 = vpop.f32.mrf.mxu0
      %v479 = vadd.f32 0.0, %v478
      %v480 = vpop.f32.mrf.mxu0
      %v481 = vadd.f32 0.0, %v480
      %v482 = vpop.f32.mrf.mxu0
      %v483 = vadd.f32 0.0, %v482
      %v484 = vpop.f32.mrf.mxu0
      %v485 = vadd.f32 0.0, %v484
      %486 = vmatprep.mubr.bf16.mxu0 0
      %487 = vmatmul.mubr.bf16.gmra.mxu0 %v315
      %v488 = vpop.f32.mrf.mxu0
      %v489 = vadd.f32 0.0, %v488
      %v490 = vpop.f32.mrf.mxu0
      %v491 = vadd.f32 0.0, %v490
      %v492 = vpop.f32.mrf.mxu0
      %v493 = vadd.f32 0.0, %v492
      %v494 = vpop.f32.mrf.mxu0
      %v495 = vadd.f32 0.0, %v494
      %496 = vmatprep.mubr.bf16.mxu0 0
      %497 = vmatmul.mubr.bf16.gmra.mxu0 %v316
      %v498 = vpop.f32.mrf.mxu0
      %v499 = vadd.f32 0.0, %v498
      %v500 = vpop.f32.mrf.mxu0
      %v501 = vadd.f32 0.0, %v500
      %v502 = vpop.f32.mrf.mxu0
      %v503 = vadd.f32 0.0, %v502
      %v504 = vpop.f32.mrf.mxu0
      %v505 = vadd.f32 0.0, %v504
      %506 = vmatprep.mubr.bf16.mxu0 0
      %507 = vmatmul.mubr.bf16.gmra.mxu0 %v317
      %v508 = vpop.f32.mrf.mxu0
      %v509 = vadd.f32 0.0, %v508
      %v510 = vpop.f32.mrf.mxu0
      %v511 = vadd.f32 0.0, %v510
      %v512 = vpop.f32.mrf.mxu0
      %v513 = vadd.f32 0.0, %v512
      %v514 = vpop.f32.mrf.mxu0
      %v515 = vadd.f32 0.0, %v514
      %516 = vmatprep.mubr.bf16.mxu0 0
      %517 = vmatmul.mubr.bf16.gmra.mxu0 %v318
      %v518 = vpop.f32.mrf.mxu0
      %v519 = vadd.f32 0.0, %v518
      %v520 = vpop.f32.mrf.mxu0
      %v521 = vadd.f32 0.0, %v520
      %v522 = vpop.f32.mrf.mxu0
      %v523 = vadd.f32 0.0, %v522
      %v524 = vpop.f32.mrf.mxu0
      %v525 = vadd.f32 0.0, %v524
      %526 = vmatprep.mubr.bf16.mxu0 0
      %527 = vmatmul.mubr.bf16.gmra.mxu0 %v319
      %v528 = vpop.f32.mrf.mxu0
      %v529 = vadd.f32 0.0, %v528
      %v530 = vpop.f32.mrf.mxu0
      %v531 = vadd.f32 0.0, %v530
      %v532 = vpop.f32.mrf.mxu0
      %v533 = vadd.f32 0.0, %v532
      %v534 = vpop.f32.mrf.mxu0
      %v535 = vadd.f32 0.0, %v534
      %536 = vdwg.mxu0
      %v537 = vlaneseq
      %v538 = vand.u32 %v537, 127
      %v539 = vadd.s32 %v538, 128
      %v540 = vlaneseq
      %v541 = vshrl.u32 %v540, 7
      %v542 = vadd.s32 %v541, 8
      %v543 = vadd.s32 %v541, 16
      %v544 = vadd.s32 %v541, 24
      %v545 = vadd.s32 %v541, 32
      %v546 = vadd.s32 %v541, 40
      %v547 = vadd.s32 %v541, 48
      %v548 = vadd.s32 %v541, 56
      %v549 = vadd.s32 %v541, 64
      %v550 = vadd.s32 %v541, 72
      %v551 = vadd.s32 %v541, 80
      %v552 = vadd.s32 %v541, 88
      %v553 = vadd.s32 %v541, 96
      %v554 = vadd.s32 %v541, 104
      %v555 = vadd.s32 %v541, 112
      %v556 = vadd.s32 %v541, 120
      %v557 = vstv %s227
      %v558 = vadd.s32 %v541, %v557
      %v559 = vadd.s32 %v542, %v557
      %v560 = vadd.s32 %v543, %v557
      %v561 = vadd.s32 %v544, %v557
      %v562 = vadd.s32 %v545, %v557
      %v563 = vadd.s32 %v546, %v557
      %v564 = vadd.s32 %v547, %v557
      %v565 = vadd.s32 %v548, %v557
      %v566 = vadd.s32 %v549, %v557
      %v567 = vadd.s32 %v550, %v557
      %v568 = vadd.s32 %v551, %v557
      %v569 = vadd.s32 %v552, %v557
      %v570 = vadd.s32 %v553, %v557
      %v571 = vadd.s32 %v554, %v557
      %v572 = vadd.s32 %v555, %v557
      %v573 = vadd.s32 %v556, %v557
      %vm574 = vcmp.ne.s32.totalorder %v558, %v538
      %vm575 = vcmp.ne.s32.totalorder %v558, %v539
      %vm576 = vcmp.ne.s32.totalorder %v559, %v538
      %vm577 = vcmp.ne.s32.totalorder %v559, %v539
      %vm578 = vcmp.ne.s32.totalorder %v560, %v538
      %vm579 = vcmp.ne.s32.totalorder %v560, %v539
      %vm580 = vcmp.ne.s32.totalorder %v561, %v538
      %vm581 = vcmp.ne.s32.totalorder %v561, %v539
      %vm582 = vcmp.ne.s32.totalorder %v562, %v538
      %vm583 = vcmp.ne.s32.totalorder %v562, %v539
      %vm584 = vcmp.ne.s32.totalorder %v563, %v538
      %vm585 = vcmp.ne.s32.totalorder %v563, %v539
      %vm586 = vcmp.ne.s32.totalorder %v564, %v538
      %vm587 = vcmp.ne.s32.totalorder %v564, %v539
      %vm588 = vcmp.ne.s32.totalorder %v565, %v538
      %vm589 = vcmp.ne.s32.totalorder %v565, %v539
      %vm590 = vcmp.ne.s32.totalorder %v566, %v538
      %vm591 = vcmp.ne.s32.totalorder %v566, %v539
      %vm592 = vcmp.ne.s32.totalorder %v567, %v538
      %vm593 = vcmp.ne.s32.totalorder %v567, %v539
      %vm594 = vcmp.ne.s32.totalorder %v568, %v538
      %vm595 = vcmp.ne.s32.totalorder %v568, %v539
      %vm596 = vcmp.ne.s32.totalorder %v569, %v538
      %vm597 = vcmp.ne.s32.totalorder %v569, %v539
      %vm598 = vcmp.ne.s32.totalorder %v570, %v538
      %vm599 = vcmp.ne.s32.totalorder %v570, %v539
      %vm600 = vcmp.ne.s32.totalorder %v571, %v538
      %vm601 = vcmp.ne.s32.totalorder %v571, %v539
      %vm602 = vcmp.ne.s32.totalorder %v572, %v538
      %vm603 = vcmp.ne.s32.totalorder %v572, %v539
      %vm604 = vcmp.ne.s32.totalorder %v573, %v538
      %vm605 = vcmp.ne.s32.totalorder %v573, %v539
      %v606 = vstv %s226
      %vm607 = vcmp.lt.s32.totalorder %v538, %v606
      %vm608 = vcmp.lt.s32.totalorder %v539, %v606
      %vm609 = vmand %vm607, %vm574
      %vm610 = vmand %vm608, %vm575
      %vm611 = vmand %vm607, %vm576
      %vm612 = vmand %vm608, %vm577
      %vm613 = vmand %vm607, %vm578
      %vm614 = vmand %vm608, %vm579
      %vm615 = vmand %vm607, %vm580
      %vm616 = vmand %vm608, %vm581
      %vm617 = vmand %vm607, %vm582
      %vm618 = vmand %vm608, %vm583
      %vm619 = vmand %vm607, %vm584
      %vm620 = vmand %vm608, %vm585
      %vm621 = vmand %vm607, %vm586
      %vm622 = vmand %vm608, %vm587
      %vm623 = vmand %vm607, %vm588
      %vm624 = vmand %vm608, %vm589
      %vm625 = vmand %vm607, %vm590
      %vm626 = vmand %vm608, %vm591
      %vm627 = vmand %vm607, %vm592
      %vm628 = vmand %vm608, %vm593
      %vm629 = vmand %vm607, %vm594
      %vm630 = vmand %vm608, %vm595
      %vm631 = vmand %vm607, %vm596
      %vm632 = vmand %vm608, %vm597
      %vm633 = vmand %vm607, %vm598
      %vm634 = vmand %vm608, %vm599
      %vm635 = vmand %vm607, %vm600
      %vm636 = vmand %vm608, %vm601
      %vm637 = vmand %vm607, %vm602
      %vm638 = vmand %vm608, %vm603
      %vm639 = vmand %vm607, %vm604
      %vm640 = vmand %vm608, %vm605
      %v641 = vld [vmem:[%s211] sm:$0xff]
      %v642 = vld [vmem:[%s211 + $0x8] sm:$0xff]
      %v643 = vld [vmem:[%s211 + $0x10] sm:$0xff]
      %v644 = vld [vmem:[%s211 + $0x18] sm:$0xff]
      %v645 = vld [vmem:[%s211 + $0x20] sm:$0xff]
      %v646 = vld [vmem:[%s211 + $0x28] sm:$0xff]
      %v647 = vld [vmem:[%s211 + $0x30] sm:$0xff]
      %v648 = vld [vmem:[%s211 + $0x38] sm:$0xff]
      %v649 = vld [vmem:[%s211 + $0x40] sm:$0xff]
      %v650 = vld [vmem:[%s211 + $0x48] sm:$0xff]
      %v651 = vld [vmem:[%s211 + $0x50] sm:$0xff]
      %v652 = vld [vmem:[%s211 + $0x58] sm:$0xff]
      %v653 = vld [vmem:[%s211 + $0x60] sm:$0xff]
      %v654 = vld [vmem:[%s211 + $0x68] sm:$0xff]
      %v655 = vld [vmem:[%s211 + $0x70] sm:$0xff]
      %v656 = vld [vmem:[%s211 + $0x78] sm:$0xff]
      %v657 = vld [vmem:[%s3] sm:$0x3]
      %658 = vset.pattern.permute.xlu0 0
      %659 = vperm.xlu0 %658, %v641
      %v660 = vpop.permute.xlu0 %659
      %661 = vset.pattern.permute.xlu0 0
      %662 = vperm.xlu0 %661, %v642
      %v663 = vpop.permute.xlu0 %662
      %664 = vset.pattern.permute.xlu0 0
      %665 = vperm.xlu0 %664, %v643
      %v666 = vpop.permute.xlu0 %665
      %667 = vset.pattern.permute.xlu0 0
      %668 = vperm.xlu0 %667, %v644
      %v669 = vpop.permute.xlu0 %668
      %670 = vset.pattern.permute.xlu0 0
      %671 = vperm.xlu0 %670, %v645
      %v672 = vpop.permute.xlu0 %671
      %673 = vset.pattern.permute.xlu0 0
      %674 = vperm.xlu0 %673, %v646
      %v675 = vpop.permute.xlu0 %674
      %676 = vset.pattern.permute.xlu0 0
      %677 = vperm.xlu0 %676, %v647
      %v678 = vpop.permute.xlu0 %677
      %679 = vset.pattern.permute.xlu0 0
      %680 = vperm.xlu0 %679, %v648
      %v681 = vpop.permute.xlu0 %680
      %682 = vset.pattern.permute.xlu0 0
      %683 = vperm.xlu0 %682, %v649
      %v684 = vpop.permute.xlu0 %683
      %685 = vset.pattern.permute.xlu0 0
      %686 = vperm.xlu0 %685, %v650
      %v687 = vpop.permute.xlu0 %686
      %688 = vset.pattern.permute.xlu0 0
      %689 = vperm.xlu0 %688, %v651
      %v690 = vpop.permute.xlu0 %689
      %691 = vset.pattern.permute.xlu0 0
      %692 = vperm.xlu0 %691, %v652
      %v693 = vpop.permute.xlu0 %692
      %694 = vset.pattern.permute.xlu0 0
      %695 = vperm.xlu0 %694, %v653
      %v696 = vpop.permute.xlu0 %695
      %697 = vset.pattern.permute.xlu0 0
      %698 = vperm.xlu0 %697, %v654
      %v699 = vpop.permute.xlu0 %698
      %700 = vset.pattern.permute.xlu0 0
      %701 = vperm.xlu0 %700, %v655
      %v702 = vpop.permute.xlu0 %701
      %703 = vset.pattern.permute.xlu0 0
      %704 = vperm.xlu0 %703, %v656
      %v705 = vpop.permute.xlu0 %704
      %v706 = vlaneseq
      %v707 = vshrl.u32 %v706, 7
      %v708 = vsub.s32 0, %v707
      %v709 = vrot.slane %v657, %v708
      %v710 = vlaneseq
      %v711 = vshrl.u32 %v710, 7
      %v712 = vsub.s32 1, %v711
      %v713 = vrot.slane %v657, %v712
      %vm714 = vcmp.eq.s32.totalorder %v660, %v709
      %vm715 = vcmp.eq.s32.totalorder %v660, %v713
      %vm716 = vcmp.eq.s32.totalorder %v663, %v709
      %vm717 = vcmp.eq.s32.totalorder %v663, %v713
      %vm718 = vcmp.eq.s32.totalorder %v666, %v709
      %vm719 = vcmp.eq.s32.totalorder %v666, %v713
      %vm720 = vcmp.eq.s32.totalorder %v669, %v709
      %vm721 = vcmp.eq.s32.totalorder %v669, %v713
      %vm722 = vcmp.eq.s32.totalorder %v672, %v709
      %vm723 = vcmp.eq.s32.totalorder %v672, %v713
      %vm724 = vcmp.eq.s32.totalorder %v675, %v709
      %vm725 = vcmp.eq.s32.totalorder %v675, %v713
      %vm726 = vcmp.eq.s32.totalorder %v678, %v709
      %vm727 = vcmp.eq.s32.totalorder %v678, %v713
      %vm728 = vcmp.eq.s32.totalorder %v681, %v709
      %vm729 = vcmp.eq.s32.totalorder %v681, %v713
      %vm730 = vcmp.eq.s32.totalorder %v684, %v709
      %vm731 = vcmp.eq.s32.totalorder %v684, %v713
      %vm732 = vcmp.eq.s32.totalorder %v687, %v709
      %vm733 = vcmp.eq.s32.totalorder %v687, %v713
      %vm734 = vcmp.eq.s32.totalorder %v690, %v709
      %vm735 = vcmp.eq.s32.totalorder %v690, %v713
      %vm736 = vcmp.eq.s32.totalorder %v693, %v709
      %vm737 = vcmp.eq.s32.totalorder %v693, %v713
      %vm738 = vcmp.eq.s32.totalorder %v696, %v709
      %vm739 = vcmp.eq.s32.totalorder %v696, %v713
      %vm740 = vcmp.eq.s32.totalorder %v699, %v709
      %vm741 = vcmp.eq.s32.totalorder %v699, %v713
      %vm742 = vcmp.eq.s32.totalorder %v702, %v709
      %vm743 = vcmp.eq.s32.totalorder %v702, %v713
      %vm744 = vcmp.eq.s32.totalorder %v705, %v709
      %vm745 = vcmp.eq.s32.totalorder %v705, %v713
      %vm746 = vmand %vm574, %vm714
      %vm747 = vmand %vm575, %vm715
      %vm748 = vmand %vm576, %vm716
      %vm749 = vmand %vm577, %vm717
      %vm750 = vmand %vm578, %vm718
      %vm751 = vmand %vm579, %vm719
      %vm752 = vmand %vm580, %vm720
      %vm753 = vmand %vm581, %vm721
      %vm754 = vmand %vm582, %vm722
      %vm755 = vmand %vm583, %vm723
      %vm756 = vmand %vm584, %vm724
      %vm757 = vmand %vm585, %vm725
      %vm758 = vmand %vm586, %vm726
      %vm759 = vmand %vm587, %vm727
      %vm760 = vmand %vm588, %vm728
      %vm761 = vmand %vm589, %vm729
      %vm762 = vmand %vm590, %vm730
      %vm763 = vmand %vm591, %vm731
      %vm764 = vmand %vm592, %vm732
      %vm765 = vmand %vm593, %vm733
      %vm766 = vmand %vm594, %vm734
      %vm767 = vmand %vm595, %vm735
      %vm768 = vmand %vm596, %vm736
      %vm769 = vmand %vm597, %vm737
      %vm770 = vmand %vm598, %vm738
      %vm771 = vmand %vm599, %vm739
      %vm772 = vmand %vm600, %vm740
      %vm773 = vmand %vm601, %vm741
      %vm774 = vmand %vm602, %vm742
      %vm775 = vmand %vm603, %vm743
      %vm776 = vmand %vm604, %vm744
      %vm777 = vmand %vm605, %vm745
      %v778 = vmax.f32 %v459, %v461
      %779 = vmax.xlane.f32.xlu0 %v778
      %v780 = vpop.xlane.xlu0 %779
      %v781 = vmax.f32 %v463, %v465
      %782 = vmax.xlane.f32.xlu0 %v781
      %v783 = vpop.xlane.xlu0 %782
      %v784 = vmax.f32 %v469, %v471
      %785 = vmax.xlane.f32.xlu0 %v784
      %v786 = vpop.xlane.xlu0 %785
      %v787 = vmax.f32 %v473, %v475
      %788 = vmax.xlane.f32.xlu0 %v787
      %v789 = vpop.xlane.xlu0 %788
      %v790 = vmax.f32 %v479, %v481
      %791 = vmax.xlane.f32.xlu0 %v790
      %v792 = vpop.xlane.xlu0 %791
      %v793 = vmax.f32 %v483, %v485
      %794 = vmax.xlane.f32.xlu0 %v793
      %v795 = vpop.xlane.xlu0 %794
      %v796 = vmax.f32 %v489, %v491
      %797 = vmax.xlane.f32.xlu0 %v796
      %v798 = vpop.xlane.xlu0 %797
      %v799 = vmax.f32 %v493, %v495
      %800 = vmax.xlane.f32.xlu0 %v799
      %v801 = vpop.xlane.xlu0 %800
      %v802 = vmax.f32 %v499, %v501
      %803 = vmax.xlane.f32.xlu0 %v802
      %v804 = vpop.xlane.xlu0 %803
      %v805 = vmax.f32 %v503, %v505
      %806 = vmax.xlane.f32.xlu0 %v805
      %v807 = vpop.xlane.xlu0 %806
      %v808 = vmax.f32 %v509, %v511
      %809 = vmax.xlane.f32.xlu0 %v808
      %v810 = vpop.xlane.xlu0 %809
      %v811 = vmax.f32 %v513, %v515
      %812 = vmax.xlane.f32.xlu0 %v811
      %v813 = vpop.xlane.xlu0 %812
      %v814 = vmax.f32 %v519, %v521
      %815 = vmax.xlane.f32.xlu0 %v814
      %v816 = vpop.xlane.xlu0 %815
      %v817 = vmax.f32 %v523, %v525
      %818 = vmax.xlane.f32.xlu0 %v817
      %v819 = vpop.xlane.xlu0 %818
      %v820 = vmax.f32 %v529, %v531
      %821 = vmax.xlane.f32.xlu0 %v820
      %v822 = vpop.xlane.xlu0 %821
      %v823 = vmax.f32 %v533, %v535
      %824 = vmax.xlane.f32.xlu0 %v823
      %v825 = vpop.xlane.xlu0 %824
      %v826 = vsub.f32 %v459, %v780
      %v827 = vsub.f32 %v461, %v780
      %v828 = vsub.f32 %v463, %v783
      %v829 = vsub.f32 %v465, %v783
      %v830 = vsub.f32 %v469, %v786
      %v831 = vsub.f32 %v471, %v786
      %v832 = vsub.f32 %v473, %v789
      %v833 = vsub.f32 %v475, %v789
      %v834 = vsub.f32 %v479, %v792
      %v835 = vsub.f32 %v481, %v792
      %v836 = vsub.f32 %v483, %v795
      %v837 = vsub.f32 %v485, %v795
      %v838 = vsub.f32 %v489, %v798
      %v839 = vsub.f32 %v491, %v798
      %v840 = vsub.f32 %v493, %v801
      %v841 = vsub.f32 %v495, %v801
      %v842 = vsub.f32 %v499, %v804
      %v843 = vsub.f32 %v501, %v804
      %v844 = vsub.f32 %v503, %v807
      %v845 = vsub.f32 %v505, %v807
      %v846 = vsub.f32 %v509, %v810
      %v847 = vsub.f32 %v511, %v810
      %v848 = vsub.f32 %v513, %v813
      %v849 = vsub.f32 %v515, %v813
      %v850 = vsub.f32 %v519, %v816
      %v851 = vsub.f32 %v521, %v816
      %v852 = vsub.f32 %v523, %v819
      %v853 = vsub.f32 %v525, %v819
      %v854 = vsub.f32 %v529, %v822
      %v855 = vsub.f32 %v531, %v822
      %v856 = vsub.f32 %v533, %v825
      %v857 = vsub.f32 %v535, %v825
      %v858 = vmul.f32 %v826, 1.442695
      %v859 = vpow.pop %v858
      %v860 = vmul.f32 %v827, 1.442695
      %v861 = vpow.pop %v860
      %v862 = vmul.f32 %v828, 1.442695
      %v863 = vpow.pop %v862
      %v864 = vmul.f32 %v829, 1.442695
      %v865 = vpow.pop %v864
      %v866 = vmul.f32 %v830, 1.442695
      %v867 = vpow.pop %v866
      %v868 = vmul.f32 %v831, 1.442695
      %v869 = vpow.pop %v868
      %v870 = vmul.f32 %v832, 1.442695
      %v871 = vpow.pop %v870
      %v872 = vmul.f32 %v833, 1.442695
      %v873 = vpow.pop %v872
      %v874 = vmul.f32 %v834, 1.442695
      %v875 = vpow.pop %v874
      %v876 = vmul.f32 %v835, 1.442695
      %v877 = vpow.pop %v876
      %v878 = vmul.f32 %v836, 1.442695
      %v879 = vpow.pop %v878
      %v880 = vmul.f32 %v837, 1.442695
      %v881 = vpow.pop %v880
      %v882 = vmul.f32 %v838, 1.442695
      %v883 = vpow.pop %v882
      %v884 = vmul.f32 %v839, 1.442695
      %v885 = vpow.pop %v884
      %v886 = vmul.f32 %v840, 1.442695
      %v887 = vpow.pop %v886
      %v888 = vmul.f32 %v841, 1.442695
      %v889 = vpow.pop %v888
      %v890 = vmul.f32 %v842, 1.442695
      %v891 = vpow.pop %v890
      %v892 = vmul.f32 %v843, 1.442695
      %v893 = vpow.pop %v892
      %v894 = vmul.f32 %v844, 1.442695
      %v895 = vpow.pop %v894
      %v896 = vmul.f32 %v845, 1.442695
      %v897 = vpow.pop %v896
      %v898 = vmul.f32 %v846, 1.442695
      %v899 = vpow.pop %v898
      %v900 = vmul.f32 %v847, 1.442695
      %v901 = vpow.pop %v900
      %v902 = vmul.f32 %v848, 1.442695
      %v903 = vpow.pop %v902
      %v904 = vmul.f32 %v849, 1.442695
      %v905 = vpow.pop %v904
      %v906 = vmul.f32 %v850, 1.442695
      %v907 = vpow.pop %v906
      %v908 = vmul.f32 %v851, 1.442695
      %v909 = vpow.pop %v908
      %v910 = vmul.f32 %v852, 1.442695
      %v911 = vpow.pop %v910
      %v912 = vmul.f32 %v853, 1.442695
      %v913 = vpow.pop %v912
      %v914 = vmul.f32 %v854, 1.442695
      %v915 = vpow.pop %v914
      %v916 = vmul.f32 %v855, 1.442695
      %v917 = vpow.pop %v916
      %v918 = vmul.f32 %v856, 1.442695
      %v919 = vpow.pop %v918
      %v920 = vmul.f32 %v857, 1.442695
      %v921 = vpow.pop %v920
      %v922 = vsel %vm609, %v859, 0.0
      %v923 = vsel %vm610, %v861, 0.0
      %v924 = vsel %vm611, %v863, 0.0
      %v925 = vsel %vm612, %v865, 0.0
      %v926 = vsel %vm613, %v867, 0.0
      %v927 = vsel %vm614, %v869, 0.0
      %v928 = vsel %vm615, %v871, 0.0
      %v929 = vsel %vm616, %v873, 0.0
      %v930 = vsel %vm617, %v875, 0.0
      %v931 = vsel %vm618, %v877, 0.0
      %v932 = vsel %vm619, %v879, 0.0
      %v933 = vsel %vm620, %v881, 0.0
      %v934 = vsel %vm621, %v883, 0.0
      %v935 = vsel %vm622, %v885, 0.0
      %v936 = vsel %vm623, %v887, 0.0
      %v937 = vsel %vm624, %v889, 0.0
      %v938 = vsel %vm625, %v891, 0.0
      %v939 = vsel %vm626, %v893, 0.0
      %v940 = vsel %vm627, %v895, 0.0
      %v941 = vsel %vm628, %v897, 0.0
      %v942 = vsel %vm629, %v899, 0.0
      %v943 = vsel %vm630, %v901, 0.0
      %v944 = vsel %vm631, %v903, 0.0
      %v945 = vsel %vm632, %v905, 0.0
      %v946 = vsel %vm633, %v907, 0.0
      %v947 = vsel %vm634, %v909, 0.0
      %v948 = vsel %vm635, %v911, 0.0
      %v949 = vsel %vm636, %v913, 0.0
      %v950 = vsel %vm637, %v915, 0.0
      %v951 = vsel %vm638, %v917, 0.0
      %v952 = vsel %vm639, %v919, 0.0
      %v953 = vsel %vm640, %v921, 0.0
      %v954 = vadd.f32 %v922, %v923
      %955 = vadd.xlane.f32.xlu0 %v954
      %v956 = vpop.xlane.xlu0 %955
      %v957 = vadd.f32 %v924, %v925
      %958 = vadd.xlane.f32.xlu0 %v957
      %v959 = vpop.xlane.xlu0 %958
      %v960 = vadd.f32 %v926, %v927
      %961 = vadd.xlane.f32.xlu0 %v960
      %v962 = vpop.xlane.xlu0 %961
      %v963 = vadd.f32 %v928, %v929
      %964 = vadd.xlane.f32.xlu0 %v963
      %v965 = vpop.xlane.xlu0 %964
      %v966 = vadd.f32 %v930, %v931
      %967 = vadd.xlane.f32.xlu0 %v966
      %v968 = vpop.xlane.xlu0 %967
      %v969 = vadd.f32 %v932, %v933
      %970 = vadd.xlane.f32.xlu0 %v969
      %v971 = vpop.xlane.xlu0 %970
      %v972 = vadd.f32 %v934, %v935
      %973 = vadd.xlane.f32.xlu0 %v972
      %v974 = vpop.xlane.xlu0 %973
      %v975 = vadd.f32 %v936, %v937
      %976 = vadd.xlane.f32.xlu0 %v975
      %v977 = vpop.xlane.xlu0 %976
      %v978 = vadd.f32 %v938, %v939
      %979 = vadd.xlane.f32.xlu0 %v978
      %v980 = vpop.xlane.xlu0 %979
      %v981 = vadd.f32 %v940, %v941
      %982 = vadd.xlane.f32.xlu0 %v981
      %v983 = vpop.xlane.xlu0 %982
      %v984 = vadd.f32 %v942, %v943
      %985 = vadd.xlane.f32.xlu0 %v984
      %v986 = vpop.xlane.xlu0 %985
      %v987 = vadd.f32 %v944, %v945
      %988 = vadd.xlane.f32.xlu0 %v987
      %v989 = vpop.xlane.xlu0 %988
      %v990 = vadd.f32 %v946, %v947
      %991 = vadd.xlane.f32.xlu0 %v990
      %v992 = vpop.xlane.xlu0 %991
      %v993 = vadd.f32 %v948, %v949
      %994 = vadd.xlane.f32.xlu0 %v993
      %v995 = vpop.xlane.xlu0 %994
      %v996 = vadd.f32 %v950, %v951
      %997 = vadd.xlane.f32.xlu0 %v996
      %v998 = vpop.xlane.xlu0 %997
      %v999 = vadd.f32 %v952, %v953
      %1000 = vadd.xlane.f32.xlu0 %v999
      %v1001 = vpop.xlane.xlu0 %1000
      %v1002 = vadd.f32 %v956, 1e-08
      %v1003 = vadd.f32 %v959, 1e-08
      %v1004 = vadd.f32 %v962, 1e-08
      %v1005 = vadd.f32 %v965, 1e-08
      %v1006 = vadd.f32 %v968, 1e-08
      %v1007 = vadd.f32 %v971, 1e-08
      %v1008 = vadd.f32 %v974, 1e-08
      %v1009 = vadd.f32 %v977, 1e-08
      %v1010 = vadd.f32 %v980, 1e-08
      %v1011 = vadd.f32 %v983, 1e-08
      %v1012 = vadd.f32 %v986, 1e-08
      %v1013 = vadd.f32 %v989, 1e-08
      %v1014 = vadd.f32 %v992, 1e-08
      %v1015 = vadd.f32 %v995, 1e-08
      %v1016 = vadd.f32 %v998, 1e-08
      %v1017 = vadd.f32 %v1001, 1e-08
      %v1018 = vsel %vm746, %v826, 0.0
      %v1019 = vsel %vm747, %v827, 0.0
      %v1020 = vsel %vm748, %v828, 0.0
      %v1021 = vsel %vm749, %v829, 0.0
      %v1022 = vsel %vm750, %v830, 0.0
      %v1023 = vsel %vm751, %v831, 0.0
      %v1024 = vsel %vm752, %v832, 0.0
      %v1025 = vsel %vm753, %v833, 0.0
      %v1026 = vsel %vm754, %v834, 0.0
      %v1027 = vsel %vm755, %v835, 0.0
      %v1028 = vsel %vm756, %v836, 0.0
      %v1029 = vsel %vm757, %v837, 0.0
      %v1030 = vsel %vm758, %v838, 0.0
      %v1031 = vsel %vm759, %v839, 0.0
      %v1032 = vsel %vm760, %v840, 0.0
      %v1033 = vsel %vm761, %v841, 0.0
      %v1034 = vsel %vm762, %v842, 0.0
      %v1035 = vsel %vm763, %v843, 0.0
      %v1036 = vsel %vm764, %v844, 0.0
      %v1037 = vsel %vm765, %v845, 0.0
      %v1038 = vsel %vm766, %v846, 0.0
      %v1039 = vsel %vm767, %v847, 0.0
      %v1040 = vsel %vm768, %v848, 0.0
      %v1041 = vsel %vm769, %v849, 0.0
      %v1042 = vsel %vm770, %v850, 0.0
      %v1043 = vsel %vm771, %v851, 0.0
      %v1044 = vsel %vm772, %v852, 0.0
      %v1045 = vsel %vm773, %v853, 0.0
      %v1046 = vsel %vm774, %v854, 0.0
      %v1047 = vsel %vm775, %v855, 0.0
      %v1048 = vsel %vm776, %v856, 0.0
      %v1049 = vsel %vm777, %v857, 0.0
      %v1050 = vadd.f32 %v1018, %v1019
      %1051 = vadd.xlane.f32.xlu0 %v1050
      %v1052 = vpop.xlane.xlu0 %1051
      %v1053 = vadd.f32 %v1020, %v1021
      %1054 = vadd.xlane.f32.xlu0 %v1053
      %v1055 = vpop.xlane.xlu0 %1054
      %v1056 = vadd.f32 %v1022, %v1023
      %1057 = vadd.xlane.f32.xlu0 %v1056
      %v1058 = vpop.xlane.xlu0 %1057
      %v1059 = vadd.f32 %v1024, %v1025
      %1060 = vadd.xlane.f32.xlu0 %v1059
      %v1061 = vpop.xlane.xlu0 %1060
      %v1062 = vadd.f32 %v1026, %v1027
      %1063 = vadd.xlane.f32.xlu0 %v1062
      %v1064 = vpop.xlane.xlu0 %1063
      %v1065 = vadd.f32 %v1028, %v1029
      %1066 = vadd.xlane.f32.xlu0 %v1065
      %v1067 = vpop.xlane.xlu0 %1066
      %v1068 = vadd.f32 %v1030, %v1031
      %1069 = vadd.xlane.f32.xlu0 %v1068
      %v1070 = vpop.xlane.xlu0 %1069
      %v1071 = vadd.f32 %v1032, %v1033
      %1072 = vadd.xlane.f32.xlu0 %v1071
      %v1073 = vpop.xlane.xlu0 %1072
      %v1074 = vadd.f32 %v1034, %v1035
      %1075 = vadd.xlane.f32.xlu0 %v1074
      %v1076 = vpop.xlane.xlu0 %1075
      %v1077 = vadd.f32 %v1036, %v1037
      %1078 = vadd.xlane.f32.xlu0 %v1077
      %v1079 = vpop.xlane.xlu0 %1078
      %v1080 = vadd.f32 %v1038, %v1039
      %1081 = vadd.xlane.f32.xlu0 %v1080
      %v1082 = vpop.xlane.xlu0 %1081
      %v1083 = vadd.f32 %v1040, %v1041
      %1084 = vadd.xlane.f32.xlu0 %v1083
      %v1085 = vpop.xlane.xlu0 %1084
      %v1086 = vadd.f32 %v1042, %v1043
      %1087 = vadd.xlane.f32.xlu0 %v1086
      %v1088 = vpop.xlane.xlu0 %1087
      %v1089 = vadd.f32 %v1044, %v1045
      %1090 = vadd.xlane.f32.xlu0 %v1089
      %v1091 = vpop.xlane.xlu0 %1090
      %v1092 = vadd.f32 %v1046, %v1047
      %1093 = vadd.xlane.f32.xlu0 %v1092
      %v1094 = vpop.xlane.xlu0 %1093
      %v1095 = vadd.f32 %v1048, %v1049
      %1096 = vadd.xlane.f32.xlu0 %v1095
      %v1097 = vpop.xlane.xlu0 %1096
      %v1098 = vld [vmem:[%s217] sm:$0xff]
      %v1099 = vld [vmem:[%s217 + $0x8] sm:$0xff]
      %v1100 = vld [vmem:[%s217 + $0x10] sm:$0xff]
      %v1101 = vld [vmem:[%s217 + $0x18] sm:$0xff]
      %v1102 = vld [vmem:[%s217 + $0x20] sm:$0xff]
      %v1103 = vld [vmem:[%s217 + $0x28] sm:$0xff]
      %v1104 = vld [vmem:[%s217 + $0x30] sm:$0xff]
      %v1105 = vld [vmem:[%s217 + $0x38] sm:$0xff]
      %v1106 = vld [vmem:[%s217 + $0x40] sm:$0xff]
      %v1107 = vld [vmem:[%s217 + $0x48] sm:$0xff]
      %v1108 = vld [vmem:[%s217 + $0x50] sm:$0xff]
      %v1109 = vld [vmem:[%s217 + $0x58] sm:$0xff]
      %v1110 = vld [vmem:[%s217 + $0x60] sm:$0xff]
      %v1111 = vld [vmem:[%s217 + $0x68] sm:$0xff]
      %v1112 = vld [vmem:[%s217 + $0x70] sm:$0xff]
      %v1113 = vld [vmem:[%s217 + $0x78] sm:$0xff]
      %v1114 = vlog2.pop %v1002
      %v1115 = vmul.f32 %v1114, 0.6931472
      %v1116 = vlog2.pop %v1003
      %v1117 = vmul.f32 %v1116, 0.6931472
      %v1118 = vlog2.pop %v1004
      %v1119 = vmul.f32 %v1118, 0.6931472
      %v1120 = vlog2.pop %v1005
      %v1121 = vmul.f32 %v1120, 0.6931472
      %v1122 = vlog2.pop %v1006
      %v1123 = vmul.f32 %v1122, 0.6931472
      %v1124 = vlog2.pop %v1007
      %v1125 = vmul.f32 %v1124, 0.6931472
      %v1126 = vlog2.pop %v1008
      %v1127 = vmul.f32 %v1126, 0.6931472
      %v1128 = vlog2.pop %v1009
      %v1129 = vmul.f32 %v1128, 0.6931472
      %v1130 = vlog2.pop %v1010
      %v1131 = vmul.f32 %v1130, 0.6931472
      %v1132 = vlog2.pop %v1011
      %v1133 = vmul.f32 %v1132, 0.6931472
      %v1134 = vlog2.pop %v1012
      %v1135 = vmul.f32 %v1134, 0.6931472
      %v1136 = vlog2.pop %v1013
      %v1137 = vmul.f32 %v1136, 0.6931472
      %v1138 = vlog2.pop %v1014
      %v1139 = vmul.f32 %v1138, 0.6931472
      %v1140 = vlog2.pop %v1015
      %v1141 = vmul.f32 %v1140, 0.6931472
      %v1142 = vlog2.pop %v1016
      %v1143 = vmul.f32 %v1142, 0.6931472
      %v1144 = vlog2.pop %v1017
      %v1145 = vmul.f32 %v1144, 0.6931472
      %v1146 = vmul.f32 %v1098, %v1115
      %v1147 = vmul.f32 %v1099, %v1117
      %v1148 = vmul.f32 %v1100, %v1119
      %v1149 = vmul.f32 %v1101, %v1121
      %v1150 = vmul.f32 %v1102, %v1123
      %v1151 = vmul.f32 %v1103, %v1125
      %v1152 = vmul.f32 %v1104, %v1127
      %v1153 = vmul.f32 %v1105, %v1129
      %v1154 = vmul.f32 %v1106, %v1131
      %v1155 = vmul.f32 %v1107, %v1133
      %v1156 = vmul.f32 %v1108, %v1135
      %v1157 = vmul.f32 %v1109, %v1137
      %v1158 = vmul.f32 %v1110, %v1139
      %v1159 = vmul.f32 %v1111, %v1141
      %v1160 = vmul.f32 %v1112, %v1143
      %v1161 = vmul.f32 %v1113, %v1145
      %v1162 = vsub.f32 %v1052, %v1146
      %v1163 = vsub.f32 %v1055, %v1147
      %v1164 = vsub.f32 %v1058, %v1148
      %v1165 = vsub.f32 %v1061, %v1149
      %v1166 = vsub.f32 %v1064, %v1150
      %v1167 = vsub.f32 %v1067, %v1151
      %v1168 = vsub.f32 %v1070, %v1152
      %v1169 = vsub.f32 %v1073, %v1153
      %v1170 = vsub.f32 %v1076, %v1154
      %v1171 = vsub.f32 %v1079, %v1155
      %v1172 = vsub.f32 %v1082, %v1156
      %v1173 = vsub.f32 %v1085, %v1157
      %v1174 = vsub.f32 %v1088, %v1158
      %v1175 = vsub.f32 %v1091, %v1159
      %v1176 = vsub.f32 %v1094, %v1160
      %v1177 = vsub.f32 %v1097, %v1161
      %v1178 = vmul.f32 %v1162, -1.0
      %v1179 = vmul.f32 %v1163, -1.0
      %v1180 = vmul.f32 %v1164, -1.0
      %v1181 = vmul.f32 %v1165, -1.0
      %v1182 = vmul.f32 %v1166, -1.0
      %v1183 = vmul.f32 %v1167, -1.0
      %v1184 = vmul.f32 %v1168, -1.0
      %v1185 = vmul.f32 %v1169, -1.0
      %v1186 = vmul.f32 %v1170, -1.0
      %v1187 = vmul.f32 %v1171, -1.0
      %v1188 = vmul.f32 %v1172, -1.0
      %v1189 = vmul.f32 %v1173, -1.0
      %v1190 = vmul.f32 %v1174, -1.0
      %v1191 = vmul.f32 %v1175, -1.0
      %v1192 = vmul.f32 %v1176, -1.0
      %v1193 = vmul.f32 %v1177, -1.0
      %v1194 = vadd.f32 %v1098, 1e-08
      %v1195 = vadd.f32 %v1099, 1e-08
      %v1196 = vadd.f32 %v1100, 1e-08
      %v1197 = vadd.f32 %v1101, 1e-08
      %v1198 = vadd.f32 %v1102, 1e-08
      %v1199 = vadd.f32 %v1103, 1e-08
      %v1200 = vadd.f32 %v1104, 1e-08
      %v1201 = vadd.f32 %v1105, 1e-08
      %v1202 = vadd.f32 %v1106, 1e-08
      %v1203 = vadd.f32 %v1107, 1e-08
      %v1204 = vadd.f32 %v1108, 1e-08
      %v1205 = vadd.f32 %v1109, 1e-08
      %v1206 = vadd.f32 %v1110, 1e-08
      %v1207 = vadd.f32 %v1111, 1e-08
      %v1208 = vadd.f32 %v1112, 1e-08
      %v1209 = vadd.f32 %v1113, 1e-08
      %v1210 = vrcp.pop %v1194
      %v1211 = vmul.f32 %v1178, %v1210
      %v1212 = vrcp.pop %v1195
      %v1213 = vmul.f32 %v1179, %v1212
      %v1214 = vrcp.pop %v1196
      %v1215 = vmul.f32 %v1180, %v1214
      %v1216 = vrcp.pop %v1197
      %v1217 = vmul.f32 %v1181, %v1216
      %v1218 = vrcp.pop %v1198
      %v1219 = vmul.f32 %v1182, %v1218
      %v1220 = vrcp.pop %v1199
      %v1221 = vmul.f32 %v1183, %v1220
      %v1222 = vrcp.pop %v1200
      %v1223 = vmul.f32 %v1184, %v1222
      %v1224 = vrcp.pop %v1201
      %v1225 = vmul.f32 %v1185, %v1224
      %v1226 = vrcp.pop %v1202
      %v1227 = vmul.f32 %v1186, %v1226
      %v1228 = vrcp.pop %v1203
      %v1229 = vmul.f32 %v1187, %v1228
      %v1230 = vrcp.pop %v1204
      %v1231 = vmul.f32 %v1188, %v1230
      %v1232 = vrcp.pop %v1205
      %v1233 = vmul.f32 %v1189, %v1232
      %v1234 = vrcp.pop %v1206
      %v1235 = vmul.f32 %v1190, %v1234
      %v1236 = vrcp.pop %v1207
      %v1237 = vmul.f32 %v1191, %v1236
      %v1238 = vrcp.pop %v1208
      %v1239 = vmul.f32 %v1192, %v1238
      %v1240 = vrcp.pop %v1209
      %v1241 = vmul.f32 %v1193, %v1240
      %vm1242 = vcmp.lt.s32.totalorder %v558, %v606
      %vm1243 = vcmp.lt.s32.totalorder %v559, %v606
      %vm1244 = vcmp.lt.s32.totalorder %v560, %v606
      %vm1245 = vcmp.lt.s32.totalorder %v561, %v606
      %vm1246 = vcmp.lt.s32.totalorder %v562, %v606
      %vm1247 = vcmp.lt.s32.totalorder %v563, %v606
      %vm1248 = vcmp.lt.s32.totalorder %v564, %v606
      %vm1249 = vcmp.lt.s32.totalorder %v565, %v606
      %vm1250 = vcmp.lt.s32.totalorder %v566, %v606
      %vm1251 = vcmp.lt.s32.totalorder %v567, %v606
      %vm1252 = vcmp.lt.s32.totalorder %v568, %v606
      %vm1253 = vcmp.lt.s32.totalorder %v569, %v606
      %vm1254 = vcmp.lt.s32.totalorder %v570, %v606
      %vm1255 = vcmp.lt.s32.totalorder %v571, %v606
      %vm1256 = vcmp.lt.s32.totalorder %v572, %v606
      %vm1257 = vcmp.lt.s32.totalorder %v573, %v606
      %v1258 = vsel %vm1242, %v1211, 0.0
      %v1259 = vsel %vm1243, %v1213, 0.0
      %v1260 = vsel %vm1244, %v1215, 0.0
      %v1261 = vsel %vm1245, %v1217, 0.0
      %v1262 = vsel %vm1246, %v1219, 0.0
      %v1263 = vsel %vm1247, %v1221, 0.0
      %v1264 = vsel %vm1248, %v1223, 0.0
      %v1265 = vsel %vm1249, %v1225, 0.0
      %v1266 = vsel %vm1250, %v1227, 0.0
      %v1267 = vsel %vm1251, %v1229, 0.0
      %v1268 = vsel %vm1252, %v1231, 0.0
      %v1269 = vsel %vm1253, %v1233, 0.0
      %v1270 = vsel %vm1254, %v1235, 0.0
      %v1271 = vsel %vm1255, %v1237, 0.0
      %v1272 = vsel %vm1256, %v1239, 0.0
      %v1273 = vsel %vm1257, %v1241, 0.0
      %vm1274 = vcmask 7168
      %1275 = vst.msk [vmem:[%s223] sm:$0xff] %vm1274, %v1258
      %1276 = vst.msk [vmem:[%s223 + $0x8] sm:$0xff] %vm1274, %v1259
      %1277 = vst.msk [vmem:[%s223 + $0x10] sm:$0xff] %vm1274, %v1260
      %1278 = vst.msk [vmem:[%s223 + $0x18] sm:$0xff] %vm1274, %v1261
      %1279 = vst.msk [vmem:[%s223 + $0x20] sm:$0xff] %vm1274, %v1262
      %1280 = vst.msk [vmem:[%s223 + $0x28] sm:$0xff] %vm1274, %v1263
      %1281 = vst.msk [vmem:[%s223 + $0x30] sm:$0xff] %vm1274, %v1264
      %1282 = vst.msk [vmem:[%s223 + $0x38] sm:$0xff] %vm1274, %v1265
      %1283 = vst.msk [vmem:[%s223 + $0x40] sm:$0xff] %vm1274, %v1266
      %1284 = vst.msk [vmem:[%s223 + $0x48] sm:$0xff] %vm1274, %v1267
      %1285 = vst.msk [vmem:[%s223 + $0x50] sm:$0xff] %vm1274, %v1268
      %1286 = vst.msk [vmem:[%s223 + $0x58] sm:$0xff] %vm1274, %v1269
      %1287 = vst.msk [vmem:[%s223 + $0x60] sm:$0xff] %vm1274, %v1270
      %1288 = vst.msk [vmem:[%s223 + $0x68] sm:$0xff] %vm1274, %v1271
      %1289 = vst.msk [vmem:[%s223 + $0x70] sm:$0xff] %vm1274, %v1272
      %1290 = vst.msk [vmem:[%s223 + $0x78] sm:$0xff] %vm1274, %v1273
      %s1291 = smul.u32 16, %s17
      %p1292 = scmp.lt.s32.totalorder %s1291, 31
      %s1293 = scalar_select %p1292, %s1291, 31
      %s1294 = smul.addr %s1293, 8
      %s1295 = scalar_lea.vmem %s5, %s1294
      // Predicated region
      $region37: #{call.1} parent=35 // pred_check
        %p1296 = pneg %p129
      $region38: #{call.1} parent=35 // pred_check_branch
        %1298 = sbr.rel (%p1296) target = $region40
      $region39: #{call.1} parent=35 // pred_region
        %s1299 = smul.u32 16, %s17
      $region40: #{call.1} parent=35 // pred_fallthru
        _
    $region36: #{call.1} parent=5 // pred_fallthru
      _
    %p1300 = scmp.le.s32.totalorder 2, %s12
    // Predicated region
    $region41: #{call.1} parent=5 // pred_check
      %p1301 = pneg %p1300
    $region42: #{call.1} parent=5 // pred_check_branch
      %1303 = sbr.rel (%p1301) target = $region44
    $region43: #{call.1} parent=5 // pred_region
      %s1304 = ssub.s32 %s12, 2
      // Predicated region
      $region45: #{call.1} parent=43 // pred_check
        %p1305 = pneg %p135
      $region46: #{call.1} parent=43 // pred_check_branch
        %1307 = sbr.rel (%p1305) target = $region48
      $region47: #{call.1} parent=43 // pred_region
        %s1308 = smul.u32 16, %s18
        %p1309 = scmp.lt.s32.totalorder %s1308, 31
        %s1310 = scalar_select %p1309, %s1308, 31
        %s1311 = smul.addr %s1310, 8
        %s1312 = scalar_lea.vmem %s5, %s1311
      $region48: #{call.1} parent=43 // pred_fallthru
        _
    $region44: #{call.1} parent=5 // pred_fallthru
      _
  $region6: #{call.1} parent=0 // loop_footer
    %s16 = sadd.s32 1, %s12
  $region7: #{call.1} parent=0 // loop_footer_branch
    %11 = sbr.rel target = $region3
  $region8: #{call.1} parent=0 // loop_exit
    _

// kernel: call.1
$region0: #{call.1}
  #allocation0 [shape = 'u32[]', space=smem, size = 0x4, offset = 0x4, fixed_abs, tag = 'smem constant byte address 0x4 - core index']
  #allocation1 [shape = 'u32[144,128]{1,0:T(1,128)}', space=vmem, size = 0x12000, scoped, tag = 'internal scratch']
  #allocation2 [shape = 's32[1]{0}', space=sflag, size = 0x4, scoped, tag = 'scoped memory for call.1']
  #allocation3 [shape = 's32[1]{0:T(128)S(6)}', space=smem, size = 0x200, scoped, tag = 'prefetched SMEM operand 0']
  %s0 = inlined_call_operand.<no memory space> [shape: s32[1], index: 0, kind: input, shape index: {}]
  %s1 = inlined_call_operand.vmem [shape: bf16[256,128], index: 1, kind: input, shape index: {}]
  %s2 = inlined_call_operand.vmem [shape: s32[256,1], index: 2, kind: input, shape index: {}]
  %s3 = inlined_call_operand.vmem [shape: s32[1,256], index: 3, kind: input, shape index: {}]
  %s4 = inlined_call_operand.vmem [shape: f32[256,1], index: 4, kind: input, shape index: {}]
  %s5 = inlined_call_operand.vmem [shape: f32[256,1], index: 5, kind: output, shape index: {}]
  %s6 = sld [smem:[#allocation0]]
  $region49: #{call.1} parent=0
    _
  %s8 = ssub.s32 1, %s6
  %s9 = scalar_select 0, %s8, %s6
  %10 = sst [smem:[#allocation3]] %s0
  loop: start=0, step=1, limit=4
  $region2: #{call.1} parent=0 // loop_pre_header
    _
  $region3: #{call.1} parent=0 // loop_header
    %s12 = sphi 0, %s16
    %p13 = scmp.ge.s32.totalorder %s12, 4
    %s20 = sphi 0, %s20
    %s22 = sphi 0, %s20
    %s23 = sphi 0, %s22
    %s37 = sphi 0, %s23
    %s43 = sphi 0, %s45
    %s46 = sphi 0, %s43
    %s47 = sphi 0, %s46
    %s63 = sphi 0, %s47
    %s67 = sphi 0, %s67
    %s69 = sphi 0, %s67
    %s70 = sphi 0, %s69
    %s84 = sphi 0, %s70
    %s90 = sphi 0, %s92
    %s93 = sphi 0, %s90
    %s94 = sphi 0, %s93
    %s110 = sphi 0, %s94
    %s116 = sphi 0, %s118
    %s119 = sphi 0, %s116
    %s120 = sphi 0, %s119
    %s136 = sphi 0, %s120
  $region4: #{call.1} parent=0 // loop_header_branch
    %15 = sbr.rel (%p13) target = $region8
  $region5: #{call.1} parent=0 // loop_body
    %s17 = ssub.s32 %s12, 1
    %s18 = ssub.s32 %s12, 2
    %s19 = sadd.s32 %s12, 1
    %s21 = sadd.s32 %s20, 1
    %p24 = scmp.eq.s32.totalorder %s12, 1
    %p25 = scmp.ne.s32.totalorder %s20, %s22
    %p26 = scmp.eq.s32.totalorder %s12, 0
    %p27 = por %p25, %p26
    %p28 = scmp.ne.s32.totalorder %s20, %s22
    %p29 = scmp.eq.s32.totalorder %s17, 1
    %p30 = por %p28, %p29
    %p31 = scmp.ne.s32.totalorder %s22, %s23
    %p32 = scmp.eq.s32.totalorder %s17, 0
    %p33 = por %p31, %p32
    %p34 = scmp.ne.s32.totalorder %s22, %s23
    %p35 = scmp.eq.s32.totalorder %s18, 1
    %p36 = por %p34, %p35
    %p38 = scmp.ne.s32.totalorder %s23, %s37
    %p39 = scmp.eq.s32.totalorder %s18, 0
    %p40 = por %p38, %p39
    %s41 = ssub.s32 %s12, %s19
    %p42 = scmp.eq.s32.totalorder %s41, 0
    %s44 = sadd.s32 %s43, 1
    %s45 = scalar_select %p42, %s43, %s44
    %p48 = pneg %p42
    %p49 = scmp.eq.s32.totalorder %s12, 1
    %p50 = por %p48, %p49
    %p51 = scmp.ne.s32.totalorder %s43, %s46
    %p52 = scmp.eq.s32.totalorder %s12, 0
    %p53 = por %p51, %p52
    %p54 = scmp.ne.s32.totalorder %s43, %s46
    %p55 = scmp.eq.s32.totalorder %s17, 1
    %p56 = por %p54, %p55
    %p57 = scmp.ne.s32.totalorder %s46, %s47
    %p58 = scmp.eq.s32.totalorder %s17, 0
    %p59 = por %p57, %p58
    %p60 = scmp.ne.s32.totalorder %s46, %s47
    %p61 = scmp.eq.s32.totalorder %s18, 1
    %p62 = por %p60, %p61
    %p64 = scmp.ne.s32.totalorder %s47, %s63
    %p65 = scmp.eq.s32.totalorder %s18, 0
    %p66 = por %p64, %p65
    %s68 = sadd.s32 %s67, 1
    %p71 = scmp.eq.s32.totalorder %s12, 1
    %p72 = scmp.ne.s32.totalorder %s67, %s69
    %p73 = scmp.eq.s32.totalorder %s12, 0
    %p74 = por %p72, %p73
    %p75 = scmp.ne.s32.totalorder %s67, %s69
    %p76 = scmp.eq.s32.totalorder %s17, 1
    %p77 = por %p75, %p76
    %p78 = scmp.ne.s32.totalorder %s69, %s70
    %p79 = scmp.eq.s32.totalorder %s17, 0
    %p80 = por %p78, %p79
    %p81 = scmp.ne.s32.totalorder %s69, %s70
    %p82 = scmp.eq.s32.totalorder %s18, 1
    %p83 = por %p81, %p82
    %p85 = scmp.ne.s32.totalorder %s70, %s84
    %p86 = scmp.eq.s32.totalorder %s18, 0
    %p87 = por %p85, %p86
    %s88 = ssub.s32 %s12, %s19
    %p89 = scmp.eq.s32.totalorder %s88, 0
    %s91 = sadd.s32 %s90, 1
    %s92 = scalar_select %p89, %s90, %s91
    %p95 = pneg %p89
    %p96 = scmp.eq.s32.totalorder %s12, 1
    %p97 = por %p95, %p96
    %p98 = scmp.ne.s32.totalorder %s90, %s93
    %p99 = scmp.eq.s32.totalorder %s12, 0
    %p100 = por %p98, %p99
    %p101 = scmp.ne.s32.totalorder %s90, %s93
    %p102 = scmp.eq.s32.totalorder %s17, 1
    %p103 = por %p101, %p102
    %p104 = scmp.ne.s32.totalorder %s93, %s94
    %p105 = scmp.eq.s32.totalorder %s17, 0
    %p106 = por %p104, %p105
    %p107 = scmp.ne.s32.totalorder %s93, %s94
    %p108 = scmp.eq.s32.totalorder %s18, 1
    %p109 = por %p107, %p108
    %p111 = scmp.ne.s32.totalorder %s94, %s110
    %p112 = scmp.eq.s32.totalorder %s18, 0
    %p113 = por %p111, %p112
    %s114 = ssub.s32 %s12, %s19
    %p115 = scmp.eq.s32.totalorder %s114, 0
    %s117 = sadd.s32 %s116, 1
    %s118 = scalar_select %p115, %s116, %s117
    %p121 = pneg %p115
    %p122 = scmp.eq.s32.totalorder %s12, 1
    %p123 = por %p121, %p122
    %p124 = scmp.ne.s32.totalorder %s116, %s119
    %p125 = scmp.eq.s32.totalorder %s12, 0
    %p126 = por %p124, %p125
    %p127 = scmp.ne.s32.totalorder %s116, %s119
    %p128 = scmp.eq.s32.totalorder %s17, 1
    %p129 = por %p127, %p128
    %p130 = scmp.ne.s32.totalorder %s119, %s120
    %p131 = scmp.eq.s32.totalorder %s17, 0
    %p132 = por %p130, %p131
    %p133 = scmp.ne.s32.totalorder %s119, %s120
    %p134 = scmp.eq.s32.totalorder %s18, 1
    %p135 = por %p133, %p134
    %p137 = scmp.ne.s32.totalorder %s120, %s136
    %p138 = scmp.eq.s32.totalorder %s18, 0
    %p139 = por %p137, %p138
    %p140 = scmp.le.s32.totalorder 1, %s12
    %p141 = scmp.lt.s32.totalorder %s12, 3
    %p142 = pnand %p140, %p141
    %p143 = pneg %p142
    // Predicated region
    $region9: #{call.1} parent=5 // pred_check
      _
    $region10: #{call.1} parent=5 // pred_check_branch
      %145 = sbr.rel (%p142) target = $region12
    $region11: #{call.1} parent=5 // pred_region
      %s146 = ssub.s32 %s12, 1
      // Predicated region
      $region13: #{call.1} parent=11 // pred_check
        %p147 = pneg %p33
      $region14: #{call.1} parent=11 // pred_check_branch
        %149 = sbr.rel (%p147) target = $region16
      $region15: #{call.1} parent=11 // pred_region
        _
      $region16: #{call.1} parent=11 // pred_fallthru
        _
      // Predicated region
      $region17: #{call.1} parent=11 // pred_check
        %p150 = pneg %p80
      $region18: #{call.1} parent=11 // pred_check_branch
        %152 = sbr.rel (%p150) target = $region20
      $region19: #{call.1} parent=11 // pred_region
        _
      $region20: #{call.1} parent=11 // pred_fallthru
        _
    $region12: #{call.1} parent=5 // pred_fallthru
      _
    %p153 = scmp.lt.s32.totalorder %s12, 2
    // Predicated region
    $region21: #{call.1} parent=5 // pred_check
      %p154 = pneg %p153
    $region22: #{call.1} parent=5 // pred_check_branch
      %156 = sbr.rel (%p154) target = $region24
    $region23: #{call.1} parent=5 // pred_region
      // Predicated region
      $region25: #{call.1} parent=23 // pred_check
        %p157 = pneg %p53
      $region26: #{call.1} parent=23 // pred_check_branch
        %159 = sbr.rel (%p157) target = $region28
      $region27: #{call.1} parent=23 // pred_region
        %s160 = smul.u32 16, %s12
        %p161 = scmp.lt.s32.totalorder %s160, 31
        %s162 = scalar_select %p161, %s160, 31
        %s163 = smul.addr %s162, 8
        %s164 = scalar_lea.vmem %s2, %s163
        %s165 = smul.u32 16, %s12
      $region28: #{call.1} parent=23 // pred_fallthru
        _
      // Predicated region
      $region29: #{call.1} parent=23 // pred_check
        %p166 = pneg %p100
      $region30: #{call.1} parent=23 // pred_check_branch
        %168 = sbr.rel (%p166) target = $region32
      $region31: #{call.1} parent=23 // pred_region
        %s169 = smul.u32 16, %s12
        %p170 = scmp.lt.s32.totalorder %s169, 31
        %s171 = scalar_select %p170, %s169, 31
        %s172 = smul.addr %s171, 8
        %s173 = scalar_lea.vmem %s4, %s172
        %s174 = smul.u32 16, %s12
      $region32: #{call.1} parent=23 // pred_fallthru
        _
    $region24: #{call.1} parent=5 // pred_fallthru
      _
    %p175 = scmp.le.s32.totalorder 1, %s12
    %p176 = scmp.lt.s32.totalorder %s12, 3
    %p177 = pnand %p175, %p176
    %p178 = pneg %p177
    // Predicated region
    $region33: #{call.1} parent=5 // pred_check
      _
    $region34: #{call.1} parent=5 // pred_check_branch
      %180 = sbr.rel (%p177) target = $region36
    $region35: #{call.1} parent=5 // pred_region
      %s181 = ssub.s32 %s12, 1
      %p182 = pneg %p33
      %p183 = pneg %p30
      %s184 = smul.u32 16, %s17
      %p185 = scmp.lt.s32.totalorder %s184, 31
      %s186 = scalar_select %p185, %s184, 31
      %s187 = smul.addr %s186, 8
      %s188 = scalar_lea.vmem %s2, %s187
      %p189 = pneg %p59
      %p190 = pneg %p56
      %p191 = pneg %p80
      %p192 = pneg %p77
      %s193 = smul.u32 16, %s17
      %p194 = scmp.lt.s32.totalorder %s193, 31
      %s195 = scalar_select %p194, %s193, 31
      %s196 = smul.addr %s195, 8
      %s197 = scalar_lea.vmem %s4, %s196
      %p198 = pneg %p106
      %p199 = pneg %p103
      %p200 = pneg %p132
      %p201 = pneg %p129
      %s202 = smul.u32 16, %s17
      %p203 = scmp.lt.s32.totalorder %s202, 31
      %s204 = scalar_select %p203, %s202, 31
      %s205 = smul.addr %s204, 8
      %s206 = scalar_lea.vmem %s5, %s205
      %s207 = smul.u32 16, %s17
      %p208 = scmp.lt.s32.totalorder %s207, 31
      %s209 = scalar_select %p208, %s207, 31
      %s210 = smul.addr %s209, 8
      %s211 = scalar_lea.vmem %s2, %s210
      %s212 = smul.u32 16, %s17
      %s213 = smul.u32 16, %s17
      %p214 = scmp.lt.s32.totalorder %s213, 31
      %s215 = scalar_select %p214, %s213, 31
      %s216 = smul.addr %s215, 8
      %s217 = scalar_lea.vmem %s4, %s216
      %s218 = smul.u32 16, %s17
      %s219 = smul.u32 16, %s17
      %p220 = scmp.lt.s32.totalorder %s219, 31
      %s221 = scalar_select %p220, %s219, 31
      %s222 = smul.addr %s221, 8
      %s223 = scalar_lea.vmem %s5, %s222
      %s224 = smul.u32 16, %s17
      %s226 = sld [smem:[#allocation3]]
      %s227 = smul.u32 %s17, 128
      %s228 = sshra.s32 %s227, 3
      %s229 = sand.u32 %s227, 7
      %s230 = smul.addr %s228, 4
      %s231 = scalar_lea.vmem %s1, %s230
      %v232 = vld [vmem:[%s231] sm:$0xf]
      %v233 = vld [vmem:[%s231 + $0x4] sm:$0xf]
      %v234 = vld [vmem:[%s231 + $0x8] sm:$0xf]
      %v235 = vld [vmem:[%s231 + $0xc] sm:$0xf]
      %v236 = vld [vmem:[%s231 + $0x10] sm:$0xf]
      %v237 = vld [vmem:[%s231 + $0x14] sm:$0xf]
      %v238 = vld [vmem:[%s231 + $0x18] sm:$0xf]
      %v239 = vld [vmem:[%s231 + $0x1c] sm:$0xf]
      %v240 = vld [vmem:[%s231 + $0x20] sm:$0xf]
      %v241 = vld [vmem:[%s231 + $0x24] sm:$0xf]
      %v242 = vld [vmem:[%s231 + $0x28] sm:$0xf]
      %v243 = vld [vmem:[%s231 + $0x2c] sm:$0xf]
      %v244 = vld [vmem:[%s231 + $0x30] sm:$0xf]
      %v245 = vld [vmem:[%s231 + $0x34] sm:$0xf]
      %v246 = vld [vmem:[%s231 + $0x38] sm:$0xf]
      %v247 = vld [vmem:[%s231 + $0x3c] sm:$0xf]
      %v248 = vld [vmem:[%s1] sm:$0xf]
      %v249 = vld [vmem:[%s1 + $0x4] sm:$0xf]
      %v250 = vld [vmem:[%s1 + $0x8] sm:$0xf]
      %v251 = vld [vmem:[%s1 + $0xc] sm:$0xf]
      %v252 = vld [vmem:[%s1 + $0x10] sm:$0xf]
      %v253 = vld [vmem:[%s1 + $0x14] sm:$0xf]
      %v254 = vld [vmem:[%s1 + $0x18] sm:$0xf]
      %v255 = vld [vmem:[%s1 + $0x1c] sm:$0xf]
      %v256 = vld [vmem:[%s1 + $0x20] sm:$0xf]
      %v257 = vld [vmem:[%s1 + $0x24] sm:$0xf]
      %v258 = vld [vmem:[%s1 + $0x28] sm:$0xf]
      %v259 = vld [vmem:[%s1 + $0x2c] sm:$0xf]
      %v260 = vld [vmem:[%s1 + $0x30] sm:$0xf]
      %v261 = vld [vmem:[%s1 + $0x34] sm:$0xf]
      %v262 = vld [vmem:[%s1 + $0x38] sm:$0xf]
      %v263 = vld [vmem:[%s1 + $0x3c] sm:$0xf]
      %v264 = vld [vmem:[%s1 + $0x40] sm:$0xf]
      %v265 = vld [vmem:[%s1 + $0x44] sm:$0xf]
      %v266 = vld [vmem:[%s1 + $0x48] sm:$0xf]
      %v267 = vld [vmem:[%s1 + $0x4c] sm:$0xf]
      %v268 = vld [vmem:[%s1 + $0x50] sm:$0xf]
      %v269 = vld [vmem:[%s1 + $0x54] sm:$0xf]
      %v270 = vld [vmem:[%s1 + $0x58] sm:$0xf]
      %v271 = vld [vmem:[%s1 + $0x5c] sm:$0xf]
      %v272 = vld [vmem:[%s1 + $0x60] sm:$0xf]
      %v273 = vld [vmem:[%s1 + $0x64] sm:$0xf]
      %v274 = vld [vmem:[%s1 + $0x68] sm:$0xf]
      %v275 = vld [vmem:[%s1 + $0x6c] sm:$0xf]
      %v276 = vld [vmem:[%s1 + $0x70] sm:$0xf]
      %v277 = vld [vmem:[%s1 + $0x74] sm:$0xf]
      %v278 = vld [vmem:[%s1 + $0x78] sm:$0xf]
      %v279 = vld [vmem:[%s1 + $0x7c] sm:$0xf]
      %v296 = vunpack.c.l.b16 %v232
      %v297 = vunpack.c.l.b16 %v233
      %v298 = vunpack.c.l.b16 %v234
      %v299 = vunpack.c.l.b16 %v235
      %v300 = vunpack.c.l.b16 %v236
      %v301 = vunpack.c.l.b16 %v237
      %v302 = vunpack.c.l.b16 %v238
      %v303 = vunpack.c.l.b16 %v239
      %v304 = vunpack.c.l.b16 %v240
      %v305 = vunpack.c.l.b16 %v241
      %v306 = vunpack.c.l.b16 %v242
      %v307 = vunpack.c.l.b16 %v243
      %v308 = vunpack.c.l.b16 %v244
      %v309 = vunpack.c.l.b16 %v245
      %v310 = vunpack.c.l.b16 %v246
      %v311 = vunpack.c.l.b16 %v247
      %v312 = vpack.c.b16 %v297, %v296
      %v313 = vpack.c.b16 %v299, %v298
      %v314 = vpack.c.b16 %v301, %v300
      %v315 = vpack.c.b16 %v303, %v302
      %v316 = vpack.c.b16 %v305, %v304
      %v317 = vpack.c.b16 %v307, %v306
      %v318 = vpack.c.b16 %v309, %v308
      %v319 = vpack.c.b16 %v311, %v310
      %v360 = vunpack.c.l.b16 %v248
      %v361 = vunpack.c.l.b16 %v249
      %v362 = vunpack.c.l.b16 %v250
      %v363 = vunpack.c.l.b16 %v251
      %v364 = vunpack.c.l.b16 %v252
      %v365 = vunpack.c.l.b16 %v253
      %v366 = vunpack.c.l.b16 %v254
      %v367 = vunpack.c.l.b16 %v255
      %v368 = vunpack.c.l.b16 %v256
      %v369 = vunpack.c.l.b16 %v257
      %v370 = vunpack.c.l.b16 %v258
      %v371 = vunpack.c.l.b16 %v259
      %v372 = vunpack.c.l.b16 %v260
      %v373 = vunpack.c.l.b16 %v261
      %v374 = vunpack.c.l.b16 %v262
      %v375 = vunpack.c.l.b16 %v263
      %v376 = vunpack.c.l.b16 %v264
      %v377 = vunpack.c.l.b16 %v265
      %v378 = vunpack.c.l.b16 %v266
      %v379 = vunpack.c.l.b16 %v267
      %v380 = vunpack.c.l.b16 %v268
      %v381 = vunpack.c.l.b16 %v269
      %v382 = vunpack.c.l.b16 %v270
      %v383 = vunpack.c.l.b16 %v271
      %v384 = vunpack.c.l.b16 %v272
      %v385 = vunpack.c.l.b16 %v273
      %v386 = vunpack.c.l.b16 %v274
      %v387 = vunpack.c.l.b16 %v275
      %v388 = vunpack.c.l.b16 %v276
      %v389 = vunpack.c.l.b16 %v277
      %v390 = vunpack.c.l.b16 %v278
      %v391 = vunpack.c.l.b16 %v279
      %v392 = vpack.c.b16 %v361, %v360
      %v393 = vpack.c.b16 %v363, %v362
      %v394 = vpack.c.b16 %v365, %v364
      %v395 = vpack.c.b16 %v367, %v366
      %v396 = vpack.c.b16 %v369, %v368
      %v397 = vpack.c.b16 %v371, %v370
      %v398 = vpack.c.b16 %v373, %v372
      %v399 = vpack.c.b16 %v375, %v374
      %v400 = vpack.c.b16 %v377, %v376
      %v401 = vpack.c.b16 %v379, %v378
      %v402 = vpack.c.b16 %v381, %v380
      %v403 = vpack.c.b16 %v383, %v382
      %v404 = vpack.c.b16 %v385, %v384
      %v405 = vpack.c.b16 %v387, %v386
      %v406 = vpack.c.b16 %v389, %v388
      %v407 = vpack.c.b16 %v391, %v390
      %424 = vmatprep.subr.bf16.mxu0 0
      %425 = vmatpush1.bf16.xpose.msra.mxu0 %v399
      %426 = vmatprep.subr.bf16.mxu0 0
      %427 = vmatpush1.bf16.xpose.msra.mxu0 %v398
      %428 = vmatprep.subr.bf16.mxu0 0
      %429 = vmatpush1.bf16.xpose.msra.mxu0 %v397
      %430 = vmatprep.subr.bf16.mxu0 0
      %431 = vmatpush1.bf16.xpose.msra.mxu0 %v396
      %432 = vmatprep.subr.bf16.mxu0 0
      %433 = vmatpush1.bf16.xpose.msra.mxu0 %v395
      %434 = vmatprep.subr.bf16.mxu0 0
      %435 = vmatpush1.bf16.xpose.msra.mxu0 %v394
      %436 = vmatprep.subr.bf16.mxu0 0
      %437 = vmatpush1.bf16.xpose.msra.mxu0 %v393
      %438 = vmatprep.subr.bf16.mxu0 0
      %439 = vmatpush1.bf16.xpose.msra.mxu0 %v392
      %440 = vmatprep.subr.bf16.mxu0 0
      %441 = vmatpush2.bf16.xpose.msra.mxu0 %v407
      %442 = vmatprep.subr.bf16.mxu0 0
      %443 = vmatpush2.bf16.xpose.msra.mxu0 %v406
      %444 = vmatprep.subr.bf16.mxu0 0
      %445 = vmatpush2.bf16.xpose.msra.mxu0 %v405
      %446 = vmatprep.subr.bf16.mxu0 0
      %447 = vmatpush2.bf16.xpose.msra.mxu0 %v404
      %448 = vmatprep.subr.bf16.mxu0 0
      %449 = vmatpush2.bf16.xpose.msra.mxu0 %v403
      %450 = vmatprep.subr.bf16.mxu0 0
      %451 = vmatpush2.bf16.xpose.msra.mxu0 %v402
      %452 = vmatprep.subr.bf16.mxu0 0
      %453 = vmatpush2.bf16.xpose.msra.mxu0 %v401
      %454 = vmatprep.subr.bf16.mxu0 0
      %455 = vmatpush2.bf16.xpose.msra.mxu0 %v400
      %456 = vmatprep.mubr.bf16.mxu0 0
      %457 = vmatmul.mubr.bf16.gmra.mxu0 %v312
      %v458 = vpop.f32.mrf.mxu0
      %v459 = vadd.f32 0.0, %v458
      %v460 = vpop.f32.mrf.mxu0
      %v461 = vadd.f32 0.0, %v460
      %v462 = vpop.f32.mrf.mxu0
      %v463 = vadd.f32 0.0, %v462
      %v464 = vpop.f32.mrf.mxu0
      %v465 = vadd.f32 0.0, %v464
      %466 = vmatprep.mubr.bf16.mxu0 0
      %467 = vmatmul.mubr.bf16.gmra.mxu0 %v313
      %v468 = vpop.f32.mrf.mxu0
      %v469 = vadd.f32 0.0, %v468
      %v470 = vpop.f32.mrf.mxu0
      %v471 = vadd.f32 0.0, %v470
      %v472 = vpop.f32.mrf.mxu0
      %v473 = vadd.f32 0.0, %v472
      %v474 = vpop.f32.mrf.mxu0
      %v475 = vadd.f32 0.0, %v474
      %476 = vmatprep.mubr.bf16.mxu0 0
      %477 = vmatmul.mubr.bf16.gmra.mxu0 %v314
      %v478 = vpop.f32.mrf.mxu0
      %v479 = vadd.f32 0.0, %v478
      %v480 = vpop.f32.mrf.mxu0
      %v481 = vadd.f32 0.0, %v480
      %v482 = vpop.f32.mrf.mxu0
      %v483 = vadd.f32 0.0, %v482
      %v484 = vpop.f32.mrf.mxu0
      %v485 = vadd.f32 0.0, %v484
      %486 = vmatprep.mubr.bf16.mxu0 0
      %487 = vmatmul.mubr.bf16.gmra.mxu0 %v315
      %v488 = vpop.f32.mrf.mxu0
      %v489 = vadd.f32 0.0, %v488
      %v490 = vpop.f32.mrf.mxu0
      %v491 = vadd.f32 0.0, %v490
      %v492 = vpop.f32.mrf.mxu0
      %v493 = vadd.f32 0.0, %v492
      %v494 = vpop.f32.mrf.mxu0
      %v495 = vadd.f32 0.0, %v494
      %496 = vmatprep.mubr.bf16.mxu0 0
      %497 = vmatmul.mubr.bf16.gmra.mxu0 %v316
      %v498 = vpop.f32.mrf.mxu0
      %v499 = vadd.f32 0.0, %v498
      %v500 = vpop.f32.mrf.mxu0
      %v501 = vadd.f32 0.0, %v500
      %v502 = vpop.f32.mrf.mxu0
      %v503 = vadd.f32 0.0, %v502
      %v504 = vpop.f32.mrf.mxu0
      %v505 = vadd.f32 0.0, %v504
      %506 = vmatprep.mubr.bf16.mxu0 0
      %507 = vmatmul.mubr.bf16.gmra.mxu0 %v317
      %v508 = vpop.f32.mrf.mxu0
      %v509 = vadd.f32 0.0, %v508
      %v510 = vpop.f32.mrf.mxu0
      %v511 = vadd.f32 0.0, %v510
      %v512 = vpop.f32.mrf.mxu0
      %v513 = vadd.f32 0.0, %v512
      %v514 = vpop.f32.mrf.mxu0
      %v515 = vadd.f32 0.0, %v514
      %516 = vmatprep.mubr.bf16.mxu0 0
      %517 = vmatmul.mubr.bf16.gmra.mxu0 %v318
      %v518 = vpop.f32.mrf.mxu0
      %v519 = vadd.f32 0.0, %v518
      %v520 = vpop.f32.mrf.mxu0
      %v521 = vadd.f32 0.0, %v520
      %v522 = vpop.f32.mrf.mxu0
      %v523 = vadd.f32 0.0, %v522
      %v524 = vpop.f32.mrf.mxu0
      %v525 = vadd.f32 0.0, %v524
      %526 = vmatprep.mubr.bf16.mxu0 0
      %527 = vmatmul.mubr.bf16.gmra.mxu0 %v319
      %v528 = vpop.f32.mrf.mxu0
      %v529 = vadd.f32 0.0, %v528
      %v530 = vpop.f32.mrf.mxu0
      %v531 = vadd.f32 0.0, %v530
      %v532 = vpop.f32.mrf.mxu0
      %v533 = vadd.f32 0.0, %v532
      %v534 = vpop.f32.mrf.mxu0
      %v535 = vadd.f32 0.0, %v534
      %536 = vdwg.mxu0
      %v537 = vlaneseq
      %v538 = vand.u32 %v537, 127
      %v539 = vadd.s32 %v538, 128
      %v540 = vlaneseq
      %v541 = vshrl.u32 %v540, 7
      %v542 = vadd.s32 %v541, 8
      %v543 = vadd.s32 %v541, 16
      %v544 = vadd.s32 %v541, 24
      %v545 = vadd.s32 %v541, 32
      %v546 = vadd.s32 %v541, 40
      %v547 = vadd.s32 %v541, 48
      %v548 = vadd.s32 %v541, 56
      %v549 = vadd.s32 %v541, 64
      %v550 = vadd.s32 %v541, 72
      %v551 = vadd.s32 %v541, 80
      %v552 = vadd.s32 %v541, 88
      %v553 = vadd.s32 %v541, 96
      %v554 = vadd.s32 %v541, 104
      %v555 = vadd.s32 %v541, 112
      %v556 = vadd.s32 %v541, 120
      %v557 = vstv %s227
      %v558 = vadd.s32 %v541, %v557
      %v559 = vadd.s32 %v542, %v557
      %v560 = vadd.s32 %v543, %v557
      %v561 = vadd.s32 %v544, %v557
      %v562 = vadd.s32 %v545, %v557
      %v563 = vadd.s32 %v546, %v557
      %v564 = vadd.s32 %v547, %v557
      %v565 = vadd.s32 %v548, %v557
      %v566 = vadd.s32 %v549, %v557
      %v567 = vadd.s32 %v550, %v557
      %v568 = vadd.s32 %v551, %v557
      %v569 = vadd.s32 %v552, %v557
      %v570 = vadd.s32 %v553, %v557
      %v571 = vadd.s32 %v554, %v557
      %v572 = vadd.s32 %v555, %v557
      %v573 = vadd.s32 %v556, %v557
      %vm574 = vcmp.ne.s32.totalorder %v558, %v538
      %vm575 = vcmp.ne.s32.totalorder %v558, %v539
      %vm576 = vcmp.ne.s32.totalorder %v559, %v538
      %vm577 = vcmp.ne.s32.totalorder %v559, %v539
      %vm578 = vcmp.ne.s32.totalorder %v560, %v538
      %vm579 = vcmp.ne.s32.totalorder %v560, %v539
      %vm580 = vcmp.ne.s32.totalorder %v561, %v538
      %vm581 = vcmp.ne.s32.totalorder %v561, %v539
      %vm582 = vcmp.ne.s32.totalorder %v562, %v538
      %vm583 = vcmp.ne.s32.totalorder %v562, %v539
      %vm584 = vcmp.ne.s32.totalorder %v563, %v538
      %vm585 = vcmp.ne.s32.totalorder %v563, %v539
      %vm586 = vcmp.ne.s32.totalorder %v564, %v538
      %vm587 = vcmp.ne.s32.totalorder %v564, %v539
      %vm588 = vcmp.ne.s32.totalorder %v565, %v538
      %vm589 = vcmp.ne.s32.totalorder %v565, %v539
      %vm590 = vcmp.ne.s32.totalorder %v566, %v538
      %vm591 = vcmp.ne.s32.totalorder %v566, %v539
      %vm592 = vcmp.ne.s32.totalorder %v567, %v538
      %vm593 = vcmp.ne.s32.totalorder %v567, %v539
      %vm594 = vcmp.ne.s32.totalorder %v568, %v538
      %vm595 = vcmp.ne.s32.totalorder %v568, %v539
      %vm596 = vcmp.ne.s32.totalorder %v569, %v538
      %vm597 = vcmp.ne.s32.totalorder %v569, %v539
      %vm598 = vcmp.ne.s32.totalorder %v570, %v538
      %vm599 = vcmp.ne.s32.totalorder %v570, %v539
      %vm600 = vcmp.ne.s32.totalorder %v571, %v538
      %vm601 = vcmp.ne.s32.totalorder %v571, %v539
      %vm602 = vcmp.ne.s32.totalorder %v572, %v538
      %vm603 = vcmp.ne.s32.totalorder %v572, %v539
      %vm604 = vcmp.ne.s32.totalorder %v573, %v538
      %vm605 = vcmp.ne.s32.totalorder %v573, %v539
      %v606 = vstv %s226
      %vm607 = vcmp.lt.s32.totalorder %v538, %v606
      %vm608 = vcmp.lt.s32.totalorder %v539, %v606
      %vm609 = vmand %vm607, %vm574
      %vm610 = vmand %vm608, %vm575
      %vm611 = vmand %vm607, %vm576
      %vm612 = vmand %vm608, %vm577
      %vm613 = vmand %vm607, %vm578
      %vm614 = vmand %vm608, %vm579
      %vm615 = vmand %vm607, %vm580
      %vm616 = vmand %vm608, %vm581
      %vm617 = vmand %vm607, %vm582
      %vm618 = vmand %vm608, %vm583
      %vm619 = vmand %vm607, %vm584
      %vm620 = vmand %vm608, %vm585
      %vm621 = vmand %vm607, %vm586
      %vm622 = vmand %vm608, %vm587
      %vm623 = vmand %vm607, %vm588
      %vm624 = vmand %vm608, %vm589
      %vm625 = vmand %vm607, %vm590
      %vm626 = vmand %vm608, %vm591
      %vm627 = vmand %vm607, %vm592
      %vm628 = vmand %vm608, %vm593
      %vm629 = vmand %vm607, %vm594
      %vm630 = vmand %vm608, %vm595
      %vm631 = vmand %vm607, %vm596
      %vm632 = vmand %vm608, %vm597
      %vm633 = vmand %vm607, %vm598
      %vm634 = vmand %vm608, %vm599
      %vm635 = vmand %vm607, %vm600
      %vm636 = vmand %vm608, %vm601
      %vm637 = vmand %vm607, %vm602
      %vm638 = vmand %vm608, %vm603
      %vm639 = vmand %vm607, %vm604
      %vm640 = vmand %vm608, %vm605
      %v641 = vld [vmem:[%s211] sm:$0xff]
      %v642 = vld [vmem:[%s211 + $0x8] sm:$0xff]
      %v643 = vld [vmem:[%s211 + $0x10] sm:$0xff]
      %v644 = vld [vmem:[%s211 + $0x18] sm:$0xff]
      %v645 = vld [vmem:[%s211 + $0x20] sm:$0xff]
      %v646 = vld [vmem:[%s211 + $0x28] sm:$0xff]
      %v647 = vld [vmem:[%s211 + $0x30] sm:$0xff]
      %v648 = vld [vmem:[%s211 + $0x38] sm:$0xff]
      %v649 = vld [vmem:[%s211 + $0x40] sm:$0xff]
      %v650 = vld [vmem:[%s211 + $0x48] sm:$0xff]
      %v651 = vld [vmem:[%s211 + $0x50] sm:$0xff]
      %v652 = vld [vmem:[%s211 + $0x58] sm:$0xff]
      %v653 = vld [vmem:[%s211 + $0x60] sm:$0xff]
      %v654 = vld [vmem:[%s211 + $0x68] sm:$0xff]
      %v655 = vld [vmem:[%s211 + $0x70] sm:$0xff]
      %v656 = vld [vmem:[%s211 + $0x78] sm:$0xff]
      %v657 = vld [vmem:[%s3] sm:$0x3]
      %658 = vset.pattern.permute.xlu0 0
      %659 = vperm.xlu0 %658, %v641
      %v660 = vpop.permute.xlu0 %659
      %661 = vset.pattern.permute.xlu0 0
      %662 = vperm.xlu0 %661, %v642
      %v663 = vpop.permute.xlu0 %662
      %664 = vset.pattern.permute.xlu0 0
      %665 = vperm.xlu0 %664, %v643
      %v666 = vpop.permute.xlu0 %665
      %667 = vset.pattern.permute.xlu0 0
      %668 = vperm.xlu0 %667, %v644
      %v669 = vpop.permute.xlu0 %668
      %670 = vset.pattern.permute.xlu0 0
      %671 = vperm.xlu0 %670, %v645
      %v672 = vpop.permute.xlu0 %671
      %673 = vset.pattern.permute.xlu0 0
      %674 = vperm.xlu0 %673, %v646
      %v675 = vpop.permute.xlu0 %674
      %676 = vset.pattern.permute.xlu0 0
      %677 = vperm.xlu0 %676, %v647
      %v678 = vpop.permute.xlu0 %677
      %679 = vset.pattern.permute.xlu0 0
      %680 = vperm.xlu0 %679, %v648
      %v681 = vpop.permute.xlu0 %680
      %682 = vset.pattern.permute.xlu0 0
      %683 = vperm.xlu0 %682, %v649
      %v684 = vpop.permute.xlu0 %683
      %685 = vset.pattern.permute.xlu0 0
      %686 = vperm.xlu0 %685, %v650
      %v687 = vpop.permute.xlu0 %686
      %688 = vset.pattern.permute.xlu0 0
      %689 = vperm.xlu0 %688, %v651
      %v690 = vpop.permute.xlu0 %689
      %691 = vset.pattern.permute.xlu0 0
      %692 = vperm.xlu0 %691, %v652
      %v693 = vpop.permute.xlu0 %692
      %694 = vset.pattern.permute.xlu0 0
      %695 = vperm.xlu0 %694, %v653
      %v696 = vpop.permute.xlu0 %695
      %697 = vset.pattern.permute.xlu0 0
      %698 = vperm.xlu0 %697, %v654
      %v699 = vpop.permute.xlu0 %698
      %700 = vset.pattern.permute.xlu0 0
      %701 = vperm.xlu0 %700, %v655
      %v702 = vpop.permute.xlu0 %701
      %703 = vset.pattern.permute.xlu0 0
      %704 = vperm.xlu0 %703, %v656
      %v705 = vpop.permute.xlu0 %704
      %v706 = vlaneseq
      %v707 = vshrl.u32 %v706, 7
      %v708 = vsub.s32 0, %v707
      %v709 = vrot.slane %v657, %v708
      %v710 = vlaneseq
      %v711 = vshrl.u32 %v710, 7
      %v712 = vsub.s32 1, %v711
      %v713 = vrot.slane %v657, %v712
      %vm714 = vcmp.eq.s32.totalorder %v660, %v709
      %vm715 = vcmp.eq.s32.totalorder %v660, %v713
      %vm716 = vcmp.eq.s32.totalorder %v663, %v709
      %vm717 = vcmp.eq.s32.totalorder %v663, %v713
      %vm718 = vcmp.eq.s32.totalorder %v666, %v709
      %vm719 = vcmp.eq.s32.totalorder %v666, %v713
      %vm720 = vcmp.eq.s32.totalorder %v669, %v709
      %vm721 = vcmp.eq.s32.totalorder %v669, %v713
      %vm722 = vcmp.eq.s32.totalorder %v672, %v709
      %vm723 = vcmp.eq.s32.totalorder %v672, %v713
      %vm724 = vcmp.eq.s32.totalorder %v675, %v709
      %vm725 = vcmp.eq.s32.totalorder %v675, %v713
      %vm726 = vcmp.eq.s32.totalorder %v678, %v709
      %vm727 = vcmp.eq.s32.totalorder %v678, %v713
      %vm728 = vcmp.eq.s32.totalorder %v681, %v709
      %vm729 = vcmp.eq.s32.totalorder %v681, %v713
      %vm730 = vcmp.eq.s32.totalorder %v684, %v709
      %vm731 = vcmp.eq.s32.totalorder %v684, %v713
      %vm732 = vcmp.eq.s32.totalorder %v687, %v709
      %vm733 = vcmp.eq.s32.totalorder %v687, %v713
      %vm734 = vcmp.eq.s32.totalorder %v690, %v709
      %vm735 = vcmp.eq.s32.totalorder %v690, %v713
      %vm736 = vcmp.eq.s32.totalorder %v693, %v709
      %vm737 = vcmp.eq.s32.totalorder %v693, %v713
      %vm738 = vcmp.eq.s32.totalorder %v696, %v709
      %vm739 = vcmp.eq.s32.totalorder %v696, %v713
      %vm740 = vcmp.eq.s32.totalorder %v699, %v709
      %vm741 = vcmp.eq.s32.totalorder %v699, %v713
      %vm742 = vcmp.eq.s32.totalorder %v702, %v709
      %vm743 = vcmp.eq.s32.totalorder %v702, %v713
      %vm744 = vcmp.eq.s32.totalorder %v705, %v709
      %vm745 = vcmp.eq.s32.totalorder %v705, %v713
      %vm746 = vmand %vm574, %vm714
      %vm747 = vmand %vm575, %vm715
      %vm748 = vmand %vm576, %vm716
      %vm749 = vmand %vm577, %vm717
      %vm750 = vmand %vm578, %vm718
      %vm751 = vmand %vm579, %vm719
      %vm752 = vmand %vm580, %vm720
      %vm753 = vmand %vm581, %vm721
      %vm754 = vmand %vm582, %vm722
      %vm755 = vmand %vm583, %vm723
      %vm756 = vmand %vm584, %vm724
      %vm757 = vmand %vm585, %vm725
      %vm758 = vmand %vm586, %vm726
      %vm759 = vmand %vm587, %vm727
      %vm760 = vmand %vm588, %vm728
      %vm761 = vmand %vm589, %vm729
      %vm762 = vmand %vm590, %vm730
      %vm763 = vmand %vm591, %vm731
      %vm764 = vmand %vm592, %vm732
      %vm765 = vmand %vm593, %vm733
      %vm766 = vmand %vm594, %vm734
      %vm767 = vmand %vm595, %vm735
      %vm768 = vmand %vm596, %vm736
      %vm769 = vmand %vm597, %vm737
      %vm770 = vmand %vm598, %vm738
      %vm771 = vmand %vm599, %vm739
      %vm772 = vmand %vm600, %vm740
      %vm773 = vmand %vm601, %vm741
      %vm774 = vmand %vm602, %vm742
      %vm775 = vmand %vm603, %vm743
      %vm776 = vmand %vm604, %vm744
      %vm777 = vmand %vm605, %vm745
      %v778 = vmax.f32 %v459, %v461
      %779 = vmax.xlane.f32.xlu0 %v778
      %v780 = vpop.xlane.xlu0 %779
      %v781 = vmax.f32 %v463, %v465
      %782 = vmax.xlane.f32.xlu0 %v781
      %v783 = vpop.xlane.xlu0 %782
      %v784 = vmax.f32 %v469, %v471
      %785 = vmax.xlane.f32.xlu0 %v784
      %v786 = vpop.xlane.xlu0 %785
      %v787 = vmax.f32 %v473, %v475
      %788 = vmax.xlane.f32.xlu0 %v787
      %v789 = vpop.xlane.xlu0 %788
      %v790 = vmax.f32 %v479, %v481
      %791 = vmax.xlane.f32.xlu0 %v790
      %v792 = vpop.xlane.xlu0 %791
      %v793 = vmax.f32 %v483, %v485
      %794 = vmax.xlane.f32.xlu0 %v793
      %v795 = vpop.xlane.xlu0 %794
      %v796 = vmax.f32 %v489, %v491
      %797 = vmax.xlane.f32.xlu0 %v796
      %v798 = vpop.xlane.xlu0 %797
      %v799 = vmax.f32 %v493, %v495
      %800 = vmax.xlane.f32.xlu0 %v799
      %v801 = vpop.xlane.xlu0 %800
      %v802 = vmax.f32 %v499, %v501
      %803 = vmax.xlane.f32.xlu0 %v802
      %v804 = vpop.xlane.xlu0 %803
      %v805 = vmax.f32 %v503, %v505
      %806 = vmax.xlane.f32.xlu0 %v805
      %v807 = vpop.xlane.xlu0 %806
      %v808 = vmax.f32 %v509, %v511
      %809 = vmax.xlane.f32.xlu0 %v808
      %v810 = vpop.xlane.xlu0 %809
      %v811 = vmax.f32 %v513, %v515
      %812 = vmax.xlane.f32.xlu0 %v811
      %v813 = vpop.xlane.xlu0 %812
      %v814 = vmax.f32 %v519, %v521
      %815 = vmax.xlane.f32.xlu0 %v814
      %v816 = vpop.xlane.xlu0 %815
      %v817 = vmax.f32 %v523, %v525
      %818 = vmax.xlane.f32.xlu0 %v817
      %v819 = vpop.xlane.xlu0 %818
      %v820 = vmax.f32 %v529, %v531
      %821 = vmax.xlane.f32.xlu0 %v820
      %v822 = vpop.xlane.xlu0 %821
      %v823 = vmax.f32 %v533, %v535
      %824 = vmax.xlane.f32.xlu0 %v823
      %v825 = vpop.xlane.xlu0 %824
      %v826 = vsub.f32 %v459, %v780
      %v827 = vsub.f32 %v461, %v780
      %v828 = vsub.f32 %v463, %v783
      %v829 = vsub.f32 %v465, %v783
      %v830 = vsub.f32 %v469, %v786
      %v831 = vsub.f32 %v471, %v786
      %v832 = vsub.f32 %v473, %v789
      %v833 = vsub.f32 %v475, %v789
      %v834 = vsub.f32 %v479, %v792
      %v835 = vsub.f32 %v481, %v792
      %v836 = vsub.f32 %v483, %v795
      %v837 = vsub.f32 %v485, %v795
      %v838 = vsub.f32 %v489, %v798
      %v839 = vsub.f32 %v491, %v798
      %v840 = vsub.f32 %v493, %v801
      %v841 = vsub.f32 %v495, %v801
      %v842 = vsub.f32 %v499, %v804
      %v843 = vsub.f32 %v501, %v804
      %v844 = vsub.f32 %v503, %v807
      %v845 = vsub.f32 %v505, %v807
      %v846 = vsub.f32 %v509, %v810
      %v847 = vsub.f32 %v511, %v810
      %v848 = vsub.f32 %v513, %v813
      %v849 = vsub.f32 %v515, %v813
      %v850 = vsub.f32 %v519, %v816
      %v851 = vsub.f32 %v521, %v816
      %v852 = vsub.f32 %v523, %v819
      %v853 = vsub.f32 %v525, %v819
      %v854 = vsub.f32 %v529, %v822
      %v855 = vsub.f32 %v531, %v822
      %v856 = vsub.f32 %v533, %v825
      %v857 = vsub.f32 %v535, %v825
      %v858 = vmul.f32 %v826, 1.442695
      %v859 = vpow.pop %v858
      %v860 = vmul.f32 %v827, 1.442695
      %v861 = vpow.pop %v860
      %v862 = vmul.f32 %v828, 1.442695
      %v863 = vpow.pop %v862
      %v864 = vmul.f32 %v829, 1.442695
      %v865 = vpow.pop %v864
      %v866 = vmul.f32 %v830, 1.442695
      %v867 = vpow.pop %v866
      %v868 = vmul.f32 %v831, 1.442695
      %v869 = vpow.pop %v868
      %v870 = vmul.f32 %v832, 1.442695
      %v871 = vpow.pop %v870
      %v872 = vmul.f32 %v833, 1.442695
      %v873 = vpow.pop %v872
      %v874 = vmul.f32 %v834, 1.442695
      %v875 = vpow.pop %v874
      %v876 = vmul.f32 %v835, 1.442695
      %v877 = vpow.pop %v876
      %v878 = vmul.f32 %v836, 1.442695
      %v879 = vpow.pop %v878
      %v880 = vmul.f32 %v837, 1.442695
      %v881 = vpow.pop %v880
      %v882 = vmul.f32 %v838, 1.442695
      %v883 = vpow.pop %v882
      %v884 = vmul.f32 %v839, 1.442695
      %v885 = vpow.pop %v884
      %v886 = vmul.f32 %v840, 1.442695
      %v887 = vpow.pop %v886
      %v888 = vmul.f32 %v841, 1.442695
      %v889 = vpow.pop %v888
      %v890 = vmul.f32 %v842, 1.442695
      %v891 = vpow.pop %v890
      %v892 = vmul.f32 %v843, 1.442695
      %v893 = vpow.pop %v892
      %v894 = vmul.f32 %v844, 1.442695
      %v895 = vpow.pop %v894
      %v896 = vmul.f32 %v845, 1.442695
      %v897 = vpow.pop %v896
      %v898 = vmul.f32 %v846, 1.442695
      %v899 = vpow.pop %v898
      %v900 = vmul.f32 %v847, 1.442695
      %v901 = vpow.pop %v900
      %v902 = vmul.f32 %v848, 1.442695
      %v903 = vpow.pop %v902
      %v904 = vmul.f32 %v849, 1.442695
      %v905 = vpow.pop %v904
      %v906 = vmul.f32 %v850, 1.442695
      %v907 = vpow.pop %v906
      %v908 = vmul.f32 %v851, 1.442695
      %v909 = vpow.pop %v908
      %v910 = vmul.f32 %v852, 1.442695
      %v911 = vpow.pop %v910
      %v912 = vmul.f32 %v853, 1.442695
      %v913 = vpow.pop %v912
      %v914 = vmul.f32 %v854, 1.442695
      %v915 = vpow.pop %v914
      %v916 = vmul.f32 %v855, 1.442695
      %v917 = vpow.pop %v916
      %v918 = vmul.f32 %v856, 1.442695
      %v919 = vpow.pop %v918
      %v920 = vmul.f32 %v857, 1.442695
      %v921 = vpow.pop %v920
      %v922 = vsel %vm609, %v859, 0.0
      %v923 = vsel %vm610, %v861, 0.0
      %v924 = vsel %vm611, %v863, 0.0
      %v925 = vsel %vm612, %v865, 0.0
      %v926 = vsel %vm613, %v867, 0.0
      %v927 = vsel %vm614, %v869, 0.0
      %v928 = vsel %vm615, %v871, 0.0
      %v929 = vsel %vm616, %v873, 0.0
      %v930 = vsel %vm617, %v875, 0.0
      %v931 = vsel %vm618, %v877, 0.0
      %v932 = vsel %vm619, %v879, 0.0
      %v933 = vsel %vm620, %v881, 0.0
      %v934 = vsel %vm621, %v883, 0.0
      %v935 = vsel %vm622, %v885, 0.0
      %v936 = vsel %vm623, %v887, 0.0
      %v937 = vsel %vm624, %v889, 0.0
      %v938 = vsel %vm625, %v891, 0.0
      %v939 = vsel %vm626, %v893, 0.0
      %v940 = vsel %vm627, %v895, 0.0
      %v941 = vsel %vm628, %v897, 0.0
      %v942 = vsel %vm629, %v899, 0.0
      %v943 = vsel %vm630, %v901, 0.0
      %v944 = vsel %vm631, %v903, 0.0
      %v945 = vsel %vm632, %v905, 0.0
      %v946 = vsel %vm633, %v907, 0.0
      %v947 = vsel %vm634, %v909, 0.0
      %v948 = vsel %vm635, %v911, 0.0
      %v949 = vsel %vm636, %v913, 0.0
      %v950 = vsel %vm637, %v915, 0.0
      %v951 = vsel %vm638, %v917, 0.0
      %v952 = vsel %vm639, %v919, 0.0
      %v953 = vsel %vm640, %v921, 0.0
      %v954 = vadd.f32 %v922, %v923
      %955 = vadd.xlane.f32.xlu0 %v954
      %v956 = vpop.xlane.xlu0 %955
      %v957 = vadd.f32 %v924, %v925
      %958 = vadd.xlane.f32.xlu0 %v957
      %v959 = vpop.xlane.xlu0 %958
      %v960 = vadd.f32 %v926, %v927
      %961 = vadd.xlane.f32.xlu0 %v960
      %v962 = vpop.xlane.xlu0 %961
      %v963 = vadd.f32 %v928, %v929
      %964 = vadd.xlane.f32.xlu0 %v963
      %v965 = vpop.xlane.xlu0 %964
      %v966 = vadd.f32 %v930, %v931
      %967 = vadd.xlane.f32.xlu0 %v966
      %v968 = vpop.xlane.xlu0 %967
      %v969 = vadd.f32 %v932, %v933
      %970 = vadd.xlane.f32.xlu0 %v969
      %v971 = vpop.xlane.xlu0 %970
      %v972 = vadd.f32 %v934, %v935
      %973 = vadd.xlane.f32.xlu0 %v972
      %v974 = vpop.xlane.xlu0 %973
      %v975 = vadd.f32 %v936, %v937
      %976 = vadd.xlane.f32.xlu0 %v975
      %v977 = vpop.xlane.xlu0 %976
      %v978 = vadd.f32 %v938, %v939
      %979 = vadd.xlane.f32.xlu0 %v978
      %v980 = vpop.xlane.xlu0 %979
      %v981 = vadd.f32 %v940, %v941
      %982 = vadd.xlane.f32.xlu0 %v981
      %v983 = vpop.xlane.xlu0 %982
      %v984 = vadd.f32 %v942, %v943
      %985 = vadd.xlane.f32.xlu0 %v984
      %v986 = vpop.xlane.xlu0 %985
      %v987 = vadd.f32 %v944, %v945
      %988 = vadd.xlane.f32.xlu0 %v987
      %v989 = vpop.xlane.xlu0 %988
      %v990 = vadd.f32 %v946, %v947
      %991 = vadd.xlane.f32.xlu0 %v990
      %v992 = vpop.xlane.xlu0 %991
      %v993 = vadd.f32 %v948, %v949
      %994 = vadd.xlane.f32.xlu0 %v993
      %v995 = vpop.xlane.xlu0 %994
      %v996 = vadd.f32 %v950, %v951
      %997 = vadd.xlane.f32.xlu0 %v996
      %v998 = vpop.xlane.xlu0 %997
      %v999 = vadd.f32 %v952, %v953
      %1000 = vadd.xlane.f32.xlu0 %v999
      %v1001 = vpop.xlane.xlu0 %1000
      %v1002 = vadd.f32 %v956, 1e-08
      %v1003 = vadd.f32 %v959, 1e-08
      %v1004 = vadd.f32 %v962, 1e-08
      %v1005 = vadd.f32 %v965, 1e-08
      %v1006 = vadd.f32 %v968, 1e-08
      %v1007 = vadd.f32 %v971, 1e-08
      %v1008 = vadd.f32 %v974, 1e-08
      %v1009 = vadd.f32 %v977, 1e-08
      %v1010 = vadd.f32 %v980, 1e-08
      %v1011 = vadd.f32 %v983, 1e-08
      %v1012 = vadd.f32 %v986, 1e-08
      %v1013 = vadd.f32 %v989, 1e-08
      %v1014 = vadd.f32 %v992, 1e-08
      %v1015 = vadd.f32 %v995, 1e-08
      %v1016 = vadd.f32 %v998, 1e-08
      %v1017 = vadd.f32 %v1001, 1e-08
      %v1018 = vsel %vm746, %v826, 0.0
      %v1019 = vsel %vm747, %v827, 0.0
      %v1020 = vsel %vm748, %v828, 0.0
      %v1021 = vsel %vm749, %v829, 0.0
      %v1022 = vsel %vm750, %v830, 0.0
      %v1023 = vsel %vm751, %v831, 0.0
      %v1024 = vsel %vm752, %v832, 0.0
      %v1025 = vsel %vm753, %v833, 0.0
      %v1026 = vsel %vm754, %v834, 0.0
      %v1027 = vsel %vm755, %v835, 0.0
      %v1028 = vsel %vm756, %v836, 0.0
      %v1029 = vsel %vm757, %v837, 0.0
      %v1030 = vsel %vm758, %v838, 0.0
      %v1031 = vsel %vm759, %v839, 0.0
      %v1032 = vsel %vm760, %v840, 0.0
      %v1033 = vsel %vm761, %v841, 0.0
      %v1034 = vsel %vm762, %v842, 0.0
      %v1035 = vsel %vm763, %v843, 0.0
      %v1036 = vsel %vm764, %v844, 0.0
      %v1037 = vsel %vm765, %v845, 0.0
      %v1038 = vsel %vm766, %v846, 0.0
      %v1039 = vsel %vm767, %v847, 0.0
      %v1040 = vsel %vm768, %v848, 0.0
      %v1041 = vsel %vm769, %v849, 0.0
      %v1042 = vsel %vm770, %v850, 0.0
      %v1043 = vsel %vm771, %v851, 0.0
      %v1044 = vsel %vm772, %v852, 0.0
      %v1045 = vsel %vm773, %v853, 0.0
      %v1046 = vsel %vm774, %v854, 0.0
      %v1047 = vsel %vm775, %v855, 0.0
      %v1048 = vsel %vm776, %v856, 0.0
      %v1049 = vsel %vm777, %v857, 0.0
      %v1050 = vadd.f32 %v1018, %v1019
      %1051 = vadd.xlane.f32.xlu0 %v1050
      %v1052 = vpop.xlane.xlu0 %1051
      %v1053 = vadd.f32 %v1020, %v1021
      %1054 = vadd.xlane.f32.xlu0 %v1053
      %v1055 = vpop.xlane.xlu0 %1054
      %v1056 = vadd.f32 %v1022, %v1023
      %1057 = vadd.xlane.f32.xlu0 %v1056
      %v1058 = vpop.xlane.xlu0 %1057
      %v1059 = vadd.f32 %v1024, %v1025
      %1060 = vadd.xlane.f32.xlu0 %v1059
      %v1061 = vpop.xlane.xlu0 %1060
      %v1062 = vadd.f32 %v1026, %v1027
      %1063 = vadd.xlane.f32.xlu0 %v1062
      %v1064 = vpop.xlane.xlu0 %1063
      %v1065 = vadd.f32 %v1028, %v1029
      %1066 = vadd.xlane.f32.xlu0 %v1065
      %v1067 = vpop.xlane.xlu0 %1066
      %v1068 = vadd.f32 %v1030, %v1031
      %1069 = vadd.xlane.f32.xlu0 %v1068
      %v1070 = vpop.xlane.xlu0 %1069
      %v1071 = vadd.f32 %v1032, %v1033
      %1072 = vadd.xlane.f32.xlu0 %v1071
      %v1073 = vpop.xlane.xlu0 %1072
      %v1074 = vadd.f32 %v1034, %v1035
      %1075 = vadd.xlane.f32.xlu0 %v1074
      %v1076 = vpop.xlane.xlu0 %1075
      %v1077 = vadd.f32 %v1036, %v1037
      %1078 = vadd.xlane.f32.xlu0 %v1077
      %v1079 = vpop.xlane.xlu0 %1078
      %v1080 = vadd.f32 %v1038, %v1039
      %1081 = vadd.xlane.f32.xlu0 %v1080
      %v1082 = vpop.xlane.xlu0 %1081
      %v1083 = vadd.f32 %v1040, %v1041
      %1084 = vadd.xlane.f32.xlu0 %v1083
      %v1085 = vpop.xlane.xlu0 %1084
      %v1086 = vadd.f32 %v1042, %v1043
      %1087 = vadd.xlane.f32.xlu0 %v1086
      %v1088 = vpop.xlane.xlu0 %1087
      %v1089 = vadd.f32 %v1044, %v1045
      %1090 = vadd.xlane.f32.xlu0 %v1089
      %v1091 = vpop.xlane.xlu0 %1090
      %v1092 = vadd.f32 %v1046, %v1047
      %1093 = vadd.xlane.f32.xlu0 %v1092
      %v1094 = vpop.xlane.xlu0 %1093
      %v1095 = vadd.f32 %v1048, %v1049
      %1096 = vadd.xlane.f32.xlu0 %v1095
      %v1097 = vpop.xlane.xlu0 %1096
      %v1098 = vld [vmem:[%s217] sm:$0xff]
      %v1099 = vld [vmem:[%s217 + $0x8] sm:$0xff]
      %v1100 = vld [vmem:[%s217 + $0x10] sm:$0xff]
      %v1101 = vld [vmem:[%s217 + $0x18] sm:$0xff]
      %v1102 = vld [vmem:[%s217 + $0x20] sm:$0xff]
      %v1103 = vld [vmem:[%s217 + $0x28] sm:$0xff]
      %v1104 = vld [vmem:[%s217 + $0x30] sm:$0xff]
      %v1105 = vld [vmem:[%s217 + $0x38] sm:$0xff]
      %v1106 = vld [vmem:[%s217 + $0x40] sm:$0xff]
      %v1107 = vld [vmem:[%s217 + $0x48] sm:$0xff]
      %v1108 = vld [vmem:[%s217 + $0x50] sm:$0xff]
      %v1109 = vld [vmem:[%s217 + $0x58] sm:$0xff]
      %v1110 = vld [vmem:[%s217 + $0x60] sm:$0xff]
      %v1111 = vld [vmem:[%s217 + $0x68] sm:$0xff]
      %v1112 = vld [vmem:[%s217 + $0x70] sm:$0xff]
      %v1113 = vld [vmem:[%s217 + $0x78] sm:$0xff]
      %v1114 = vlog2.pop %v1002
      %v1115 = vmul.f32 %v1114, 0.6931472
      %v1116 = vlog2.pop %v1003
      %v1117 = vmul.f32 %v1116, 0.6931472
      %v1118 = vlog2.pop %v1004
      %v1119 = vmul.f32 %v1118, 0.6931472
      %v1120 = vlog2.pop %v1005
      %v1121 = vmul.f32 %v1120, 0.6931472
      %v1122 = vlog2.pop %v1006
      %v1123 = vmul.f32 %v1122, 0.6931472
      %v1124 = vlog2.pop %v1007
      %v1125 = vmul.f32 %v1124, 0.6931472
      %v1126 = vlog2.pop %v1008
      %v1127 = vmul.f32 %v1126, 0.6931472
      %v1128 = vlog2.pop %v1009
      %v1129 = vmul.f32 %v1128, 0.6931472
      %v1130 = vlog2.pop %v1010
      %v1131 = vmul.f32 %v1130, 0.6931472
      %v1132 = vlog2.pop %v1011
      %v1133 = vmul.f32 %v1132, 0.6931472
      %v1134 = vlog2.pop %v1012
      %v1135 = vmul.f32 %v1134, 0.6931472
      %v1136 = vlog2.pop %v1013
      %v1137 = vmul.f32 %v1136, 0.6931472
      %v1138 = vlog2.pop %v1014
      %v1139 = vmul.f32 %v1138, 0.6931472
      %v1140 = vlog2.pop %v1015
      %v1141 = vmul.f32 %v1140, 0.6931472
      %v1142 = vlog2.pop %v1016
      %v1143 = vmul.f32 %v1142, 0.6931472
      %v1144 = vlog2.pop %v1017
      %v1145 = vmul.f32 %v1144, 0.6931472
      %v1146 = vmul.f32 %v1098, %v1115
      %v1147 = vmul.f32 %v1099, %v1117
      %v1148 = vmul.f32 %v1100, %v1119
      %v1149 = vmul.f32 %v1101, %v1121
      %v1150 = vmul.f32 %v1102, %v1123
      %v1151 = vmul.f32 %v1103, %v1125
      %v1152 = vmul.f32 %v1104, %v1127
      %v1153 = vmul.f32 %v1105, %v1129
      %v1154 = vmul.f32 %v1106, %v1131
      %v1155 = vmul.f32 %v1107, %v1133
      %v1156 = vmul.f32 %v1108, %v1135
      %v1157 = vmul.f32 %v1109, %v1137
      %v1158 = vmul.f32 %v1110, %v1139
      %v1159 = vmul.f32 %v1111, %v1141
      %v1160 = vmul.f32 %v1112, %v1143
      %v1161 = vmul.f32 %v1113, %v1145
      %v1162 = vsub.f32 %v1052, %v1146
      %v1163 = vsub.f32 %v1055, %v1147
      %v1164 = vsub.f32 %v1058, %v1148
      %v1165 = vsub.f32 %v1061, %v1149
      %v1166 = vsub.f32 %v1064, %v1150
      %v1167 = vsub.f32 %v1067, %v1151
      %v1168 = vsub.f32 %v1070, %v1152
      %v1169 = vsub.f32 %v1073, %v1153
      %v1170 = vsub.f32 %v1076, %v1154
      %v1171 = vsub.f32 %v1079, %v1155
      %v1172 = vsub.f32 %v1082, %v1156
      %v1173 = vsub.f32 %v1085, %v1157
      %v1174 = vsub.f32 %v1088, %v1158
      %v1175 = vsub.f32 %v1091, %v1159
      %v1176 = vsub.f32 %v1094, %v1160
      %v1177 = vsub.f32 %v1097, %v1161
      %v1178 = vmul.f32 %v1162, -1.0
      %v1179 = vmul.f32 %v1163, -1.0
      %v1180 = vmul.f32 %v1164, -1.0
      %v1181 = vmul.f32 %v1165, -1.0
      %v1182 = vmul.f32 %v1166, -1.0
      %v1183 = vmul.f32 %v1167, -1.0
      %v1184 = vmul.f32 %v1168, -1.0
      %v1185 = vmul.f32 %v1169, -1.0
      %v1186 = vmul.f32 %v1170, -1.0
      %v1187 = vmul.f32 %v1171, -1.0
      %v1188 = vmul.f32 %v1172, -1.0
      %v1189 = vmul.f32 %v1173, -1.0
      %v1190 = vmul.f32 %v1174, -1.0
      %v1191 = vmul.f32 %v1175, -1.0
      %v1192 = vmul.f32 %v1176, -1.0
      %v1193 = vmul.f32 %v1177, -1.0
      %v1194 = vadd.f32 %v1098, 1e-08
      %v1195 = vadd.f32 %v1099, 1e-08
      %v1196 = vadd.f32 %v1100, 1e-08
      %v1197 = vadd.f32 %v1101, 1e-08
      %v1198 = vadd.f32 %v1102, 1e-08
      %v1199 = vadd.f32 %v1103, 1e-08
      %v1200 = vadd.f32 %v1104, 1e-08
      %v1201 = vadd.f32 %v1105, 1e-08
      %v1202 = vadd.f32 %v1106, 1e-08
      %v1203 = vadd.f32 %v1107, 1e-08
      %v1204 = vadd.f32 %v1108, 1e-08
      %v1205 = vadd.f32 %v1109, 1e-08
      %v1206 = vadd.f32 %v1110, 1e-08
      %v1207 = vadd.f32 %v1111, 1e-08
      %v1208 = vadd.f32 %v1112, 1e-08
      %v1209 = vadd.f32 %v1113, 1e-08
      %v1210 = vrcp.pop %v1194
      %v1211 = vmul.f32 %v1178, %v1210
      %v1212 = vrcp.pop %v1195
      %v1213 = vmul.f32 %v1179, %v1212
      %v1214 = vrcp.pop %v1196
      %v1215 = vmul.f32 %v1180, %v1214
      %v1216 = vrcp.pop %v1197
      %v1217 = vmul.f32 %v1181, %v1216
      %v1218 = vrcp.pop %v1198
      %v1219 = vmul.f32 %v1182, %v1218
      %v1220 = vrcp.pop %v1199
      %v1221 = vmul.f32 %v1183, %v1220
      %v1222 = vrcp.pop %v1200
      %v1223 = vmul.f32 %v1184, %v1222
      %v1224 = vrcp.pop %v1201
      %v1225 = vmul.f32 %v1185, %v1224
      %v1226 = vrcp.pop %v1202
      %v1227 = vmul.f32 %v1186, %v1226
      %v1228 = vrcp.pop %v1203
      %v1229 = vmul.f32 %v1187, %v1228
      %v1230 = vrcp.pop %v1204
      %v1231 = vmul.f32 %v1188, %v1230
      %v1232 = vrcp.pop %v1205
      %v1233 = vmul.f32 %v1189, %v1232
      %v1234 = vrcp.pop %v1206
      %v1235 = vmul.f32 %v1190, %v1234
      %v1236 = vrcp.pop %v1207
      %v1237 = vmul.f32 %v1191, %v1236
      %v1238 = vrcp.pop %v1208
      %v1239 = vmul.f32 %v1192, %v1238
      %v1240 = vrcp.pop %v1209
      %v1241 = vmul.f32 %v1193, %v1240
      %vm1242 = vcmp.lt.s32.totalorder %v558, %v606
      %vm1243 = vcmp.lt.s32.totalorder %v559, %v606
      %vm1244 = vcmp.lt.s32.totalorder %v560, %v606
      %vm1245 = vcmp.lt.s32.totalorder %v561, %v606
      %vm1246 = vcmp.lt.s32.totalorder %v562, %v606
      %vm1247 = vcmp.lt.s32.totalorder %v563, %v606
      %vm1248 = vcmp.lt.s32.totalorder %v564, %v606
      %vm1249 = vcmp.lt.s32.totalorder %v565, %v606
      %vm1250 = vcmp.lt.s32.totalorder %v566, %v606
      %vm1251 = vcmp.lt.s32.totalorder %v567, %v606
      %vm1252 = vcmp.lt.s32.totalorder %v568, %v606
      %vm1253 = vcmp.lt.s32.totalorder %v569, %v606
      %vm1254 = vcmp.lt.s32.totalorder %v570, %v606
      %vm1255 = vcmp.lt.s32.totalorder %v571, %v606
      %vm1256 = vcmp.lt.s32.totalorder %v572, %v606
      %vm1257 = vcmp.lt.s32.totalorder %v573, %v606
      %v1258 = vsel %vm1242, %v1211, 0.0
      %v1259 = vsel %vm1243, %v1213, 0.0
      %v1260 = vsel %vm1244, %v1215, 0.0
      %v1261 = vsel %vm1245, %v1217, 0.0
      %v1262 = vsel %vm1246, %v1219, 0.0
      %v1263 = vsel %vm1247, %v1221, 0.0
      %v1264 = vsel %vm1248, %v1223, 0.0
      %v1265 = vsel %vm1249, %v1225, 0.0
      %v1266 = vsel %vm1250, %v1227, 0.0
      %v1267 = vsel %vm1251, %v1229, 0.0
      %v1268 = vsel %vm1252, %v1231, 0.0
      %v1269 = vsel %vm1253, %v1233, 0.0
      %v1270 = vsel %vm1254, %v1235, 0.0
      %v1271 = vsel %vm1255, %v1237, 0.0
      %v1272 = vsel %vm1256, %v1239, 0.0
      %v1273 = vsel %vm1257, %v1241, 0.0
      %vm1274 = vcmask 7168
      %1275 = vst.msk [vmem:[%s223] sm:$0xff] %vm1274, %v1258
      %1276 = vst.msk [vmem:[%s223 + $0x8] sm:$0xff] %vm1274, %v1259
      %1277 = vst.msk [vmem:[%s223 + $0x10] sm:$0xff] %vm1274, %v1260
      %1278 = vst.msk [vmem:[%s223 + $0x18] sm:$0xff] %vm1274, %v1261
      %1279 = vst.msk [vmem:[%s223 + $0x20] sm:$0xff] %vm1274, %v1262
      %1280 = vst.msk [vmem:[%s223 + $0x28] sm:$0xff] %vm1274, %v1263
      %1281 = vst.msk [vmem:[%s223 + $0x30] sm:$0xff] %vm1274, %v1264
      %1282 = vst.msk [vmem:[%s223 + $0x38] sm:$0xff] %vm1274, %v1265
      %1283 = vst.msk [vmem:[%s223 + $0x40] sm:$0xff] %vm1274, %v1266
      %1284 = vst.msk [vmem:[%s223 + $0x48] sm:$0xff] %vm1274, %v1267
      %1285 = vst.msk [vmem:[%s223 + $0x50] sm:$0xff] %vm1274, %v1268
      %1286 = vst.msk [vmem:[%s223 + $0x58] sm:$0xff] %vm1274, %v1269
      %1287 = vst.msk [vmem:[%s223 + $0x60] sm:$0xff] %vm1274, %v1270
      %1288 = vst.msk [vmem:[%s223 + $0x68] sm:$0xff] %vm1274, %v1271
      %1289 = vst.msk [vmem:[%s223 + $0x70] sm:$0xff] %vm1274, %v1272
      %1290 = vst.msk [vmem:[%s223 + $0x78] sm:$0xff] %vm1274, %v1273
      %s1291 = smul.u32 16, %s17
      %p1292 = scmp.lt.s32.totalorder %s1291, 31
      %s1293 = scalar_select %p1292, %s1291, 31
      %s1294 = smul.addr %s1293, 8
      %s1295 = scalar_lea.vmem %s5, %s1294
      // Predicated region
      $region37: #{call.1} parent=35 // pred_check
        %p1296 = pneg %p129
      $region38: #{call.1} parent=35 // pred_check_branch
        %1298 = sbr.rel (%p1296) target = $region40
      $region39: #{call.1} parent=35 // pred_region
        %s1299 = smul.u32 16, %s17
      $region40: #{call.1} parent=35 // pred_fallthru
        _
    $region36: #{call.1} parent=5 // pred_fallthru
      _
    %p1300 = scmp.le.s32.totalorder 2, %s12
    // Predicated region
    $region41: #{call.1} parent=5 // pred_check
      %p1301 = pneg %p1300
    $region42: #{call.1} parent=5 // pred_check_branch
      %1303 = sbr.rel (%p1301) target = $region44
    $region43: #{call.1} parent=5 // pred_region
      %s1304 = ssub.s32 %s12, 2
      // Predicated region
      $region45: #{call.1} parent=43 // pred_check
        %p1305 = pneg %p135
      $region46: #{call.1} parent=43 // pred_check_branch
        %1307 = sbr.rel (%p1305) target = $region48
      $region47: #{call.1} parent=43 // pred_region
        %s1308 = smul.u32 16, %s18
        %p1309 = scmp.lt.s32.totalorder %s1308, 31
        %s1310 = scalar_select %p1309, %s1308, 31
        %s1311 = smul.addr %s1310, 8
        %s1312 = scalar_lea.vmem %s5, %s1311
      $region48: #{call.1} parent=43 // pred_fallthru
        _
    $region44: #{call.1} parent=5 // pred_fallthru
      _
  $region6: #{call.1} parent=0 // loop_footer
    %s16 = sadd.s32 1, %s12
  $region7: #{call.1} parent=0 // loop_footer_branch
    %11 = sbr.rel target = $region3
  $region8: #{call.1} parent=0 // loop_exit
    _

</llo_original>
